<compile_context>
chip_gen: v5e
topology: v5e:2x2
jax: 0.10.0
libtpu: 0.0.40
codegen_flags: <defaults>
</compile_context>

<pallas_src>
import functools
import math

import jax
import jax.numpy as jnp
from jax.experimental import pallas as pl
from jax.experimental.pallas import tpu as pltpu


def _vmem_limit_bytes():
    """Generation-aware scoped-VMEM limit with headroom for compiler scratch."""
    try:
        phys = int(pltpu.get_tpu_info().vmem_capacity_bytes)
        if phys <= 0:
            raise ValueError("bad vmem capacity")
    except Exception:
        phys = 64 << 20                      # conservative (v7x per-TC physical)
    return int(min((phys * 5) // 8, 80 << 20))   # ~40 MiB on v7x, 80 MiB v5e/v6e


def _packing(c):
    """Smallest pack with (pack*c) % 128 == 0 so stores are full-lane (unmasked)."""
    if c % 128 == 0:
        return 1, c
    pack = 128 // math.gcd(c, 128)
    width = pack * c
    if width > 1024:                         # S too large / chunks too skinny
        return 1, c
    return pack, width


def _choose_blocking(n_rows, width, itemsize, vmem_limit, fixed_bytes):
    """Pick (block_rows, chunk_rows, n_chunks) for a row-wise (n_rows, width) kernel."""
    g = 8 * max(1, 4 // itemsize)            # sublane granularity: 8 f32, 16 bf16
    lane_width = ((max(width, 128) + 127) // 128) * 128
    rows_g = max(g, ((n_rows + g - 1) // g) * g)

    # Inner chunk: each f32 intermediate <= ~48 KiB (~12 vregs at width 128) so
    # x, (x-mu), (x-mu)^2, y, stats and weights stay well under 64 vregs.
    chunk = max(g, min(128, (48 * 1024) // (lane_width * 4)))
    chunk = max(g, (chunk // g) * g)
    chunk = min(chunk, rows_g)
    chunk = max(g, (chunk // g) * g)

    # Outer block: as big as double-buffered in+out allows, capped at ~8 MiB
    # per input block (per-grid-step overhead becomes a few percent).
    row_bytes = lane_width * itemsize
    budget = max(1 << 20, (vmem_limit - fixed_bytes) // 4 - (1 << 20))
    block_bytes = min(8 << 20, budget)
    block_rows = max(chunk, (block_bytes // row_bytes) // chunk * chunk)
    block_rows = min(block_rows, ((rows_g + chunk - 1) // chunk) * chunk)
    return block_rows, chunk, block_rows // chunk


def _layernorm_kernel(*refs, packed, seg, chunk_rows, n_chunks, eps):
    """Row-wise LayerNorm on a (block_rows, width) tile.

    packed: width // seg logical rows are packed per 128-lane tile row.
    Per-`seg`-lane-segment sums are computed with one MXU matmul per statistic
    against a constant block-diagonal 0/1 matrix; the matmul result is the
    segment sum already broadcast to every lane of its segment.
    """
    if packed:
        x_ref, s_ref, w_ref, b_ref, o_ref = refs
    else:
        x_ref, w_ref, b_ref, o_ref = refs
        s_ref = None

    w = w_ref[...]                           # (1, width) f32, pre-cast/tiled in wrapper
    b = b_ref[...]                           # (1, width) f32
    inv_c = jnp.float32(1.0 / seg)
    eps_f = jnp.float32(eps)

    def body(ci, carry):
        r0 = pl.multiple_of(ci * chunk_rows, 8)
        x = x_ref[pl.ds(r0, chunk_rows), :].astype(jnp.float32)
        if packed:
            s_mat = s_ref[...]               # (width, width) block-diagonal 0/1
            mu = jnp.dot(x, s_mat, preferred_element_type=jnp.float32,
                         precision=jax.lax.Precision.HIGHEST) * inv_c
            d = x - mu
            var = jnp.dot(d * d, s_mat, preferred_element_type=jnp.float32,
                          precision=jax.lax.Precision.HIGHEST) * inv_c
        else:
            mu = jnp.mean(x, axis=-1, keepdims=True)
            d = x - mu
            var = jnp.mean(d * d, axis=-1, keepdims=True)
        y = d * jax.lax.rsqrt(var + eps_f) * w + b
        o_ref[pl.ds(r0, chunk_rows), :] = y.astype(o_ref.dtype)
        return carry

    jax.lax.fori_loop(0, n_chunks, body, 0)


def withbias_layernorm(x, weight, bias, *, eps=1e-5):
    """(x - mean(x, -1)) / sqrt(var(x, -1, biased) + eps) * weight + bias."""
    orig_shape = x.shape
    c = int(orig_shape[-1])
    n = 1
    for d in orig_shape[:-1]:
        n *= int(d)
    x2 = x.reshape(n, c)

    w = weight.reshape(1, c).astype(jnp.float32)
    b = bias.reshape(1, c).astype(jnp.float32)

    pack, width = _packing(c)
    pad_rows = 0
    if pack > 1:
        rem = n % pack
        if rem:
            pad_rows = pack - rem            # pad a few rows; beats masked stores
            x2 = jnp.pad(x2, ((0, pad_rows), (0, 0)))
        xk = x2.reshape((n + pad_rows) // pack, width)   # free row-major reshape
        wk = jnp.tile(w, (1, pack))
        bk = jnp.tile(b, (1, pack))
    else:
        xk, wk, bk = x2, w, b

    rows = xk.shape[0]
    packed = pack > 1

    fixed_bytes = 2 * width * 4
    if packed:
        lane = jnp.arange(width, dtype=jnp.int32)
        seg_id = lane // c
        s_mat = (seg_id[:, None] == seg_id[None, :]).astype(jnp.float32)
        fixed_bytes += width * width * 4

    vmem_limit = _vmem_limit_bytes()
    block_rows, chunk_rows, n_chunks = _choose_blocking(
        rows, width, xk.dtype.itemsize, vmem_limit, fixed_bytes)

    kernel = functools.partial(
        _layernorm_kernel, packed=packed, seg=c,
        chunk_rows=chunk_rows, n_chunks=n_chunks, eps=eps)

    in_specs = [pl.BlockSpec((block_rows, width), lambda i: (i, 0))]
    args = [xk]
    if packed:
        in_specs.append(pl.BlockSpec((width, width), lambda i: (0, 0)))
        args.append(s_mat)
    in_specs += [pl.BlockSpec((1, width), lambda i: (0, 0)),
                 pl.BlockSpec((1, width), lambda i: (0, 0))]
    args += [wk, bk]

    # TODO(synk): on v7x verify in the trace that the row grid shards across both
    # TensorCores; if not, switch this axis to pltpu.CORE_PARALLEL.
    out = pl.pallas_call(
        kernel,
        out_shape=jax.ShapeDtypeStruct((rows, width), x.dtype),
        grid_spec=pltpu.PrefetchScalarGridSpec(
            num_scalar_prefetch=0,
            grid=(pl.cdiv(rows, block_rows),),   # ragged last block handled by Pallas
            in_specs=in_specs,
            out_specs=pl.BlockSpec((block_rows, width), lambda i: (i, 0)),
        ),
        compiler_params=pltpu.CompilerParams(
            dimension_semantics=("parallel",),
            vmem_limit_bytes=vmem_limit,
        ),
    )(*args)

    if pad_rows:
        out = out.reshape(rows * pack, c)[:n]
    return out.reshape(orig_shape)


def _reference(x, weight, bias, eps=1e-5):
    x32 = x.astype(jnp.float32)
    mu = jnp.mean(x32, axis=-1, keepdims=True)
    sigma = jnp.mean((x32 - mu) ** 2, axis=-1, keepdims=True)
    y = (x32 - mu) / jnp.sqrt(sigma + eps) * weight.astype(jnp.float32) \
        + bias.astype(jnp.float32)
    return y.astype(x.dtype)


def _check(x, w, b, atol, rtol):
    out = jax.block_until_ready(withbias_layernorm(x, w, b))
    ref = _reference(x, w, b)
    assert out.shape == x.shape and out.dtype == x.dtype
    o32 = out.astype(jnp.float32)
    r32 = ref.astype(jnp.float32)
    err = float(jnp.max(jnp.abs(o32 - r32)))
    assert jnp.allclose(o32, r32, atol=atol, rtol=rtol), err


if __name__ == "__main__":
    key = jax.random.PRNGKey(0)
    k = jax.random.split(key, 8)

    # 1) Packed path (C=32 -> pack 4, width 128); nonzero mean exercises the
    #    two-pass variance + HIGHEST-precision segment sums.
    C = 32
    x = jax.random.normal(k[0], (2, 16, 16, C), dtype=jnp.float32) + 3.0
    w = 1.0 + 0.1 * jax.random.normal(k[1], (C,), dtype=jnp.float32)
    b = 0.1 * jax.random.normal(k[2], (C,), dtype=jnp.float32)
    _check(x, w, b, 2e-5, 2e-5)

    # 2) Packed path with rows not divisible by pack (few-row padding path).
    x2 = jax.random.normal(k[3], (3, 11, C), dtype=jnp.float32)
    _check(x2, w, b, 2e-5, 2e-5)

    # 3) Packed path, multi-step grid + ragged last block.
    x3 = jax.random.normal(k[4], (1, 70000, C), dtype=jnp.float32)
    _check(x3, w, b, 2e-5, 2e-5)

    # 4) Packed, non-power-of-two segment (C=48 -> pack 8, width 384).
    C4 = 48
    x4 = jax.random.normal(k[5], (2, 8, C4), dtype=jnp.float32)
    w4 = 1.0 + 0.05 * jnp.cos(jnp.arange(C4, dtype=jnp.float32))
    b4 = 0.05 * jnp.sin(jnp.arange(C4, dtype=jnp.float32))
    _check(x4, w4, b4, 2e-5, 2e-5)

    # 5) Plain lane-dense path (C is a multiple of 128, no packing needed).
    C5 = 256
    x5 = jax.random.normal(k[6], (2, 64, C5), dtype=jnp.float32)
    _check(x5, jnp.ones((C5,), jnp.float32), jnp.zeros((C5,), jnp.float32), 2e-5, 2e-5)

    # 6) bf16 input (16-row sublane granularity for chunk/block rounding).
    xb = jax.random.normal(k[7], (2, 16, 16, C), dtype=jnp.float32).astype(jnp.bfloat16)
    _check(xb, w, b, 1e-1, 5e-2)

    # TODO(synk): mu_sigma=True variant (returning (x, mu, sigma)) not exposed;
    # only the module-default mu_sigma=False forward is implemented.
    print("KERNEL_OK")
</pallas_src>

<mosaic_0001>
module attributes {stable_mosaic.version = 11 : i64} {
  func.func @_layernorm_kernel(%arg0: i32, %arg1: memref<192x128xf32, #tpu.memory_space<vmem>>, %arg2: memref<128x128xf32, #tpu.memory_space<vmem>>, %arg3: memref<1x128xf32, #tpu.memory_space<vmem>>, %arg4: memref<1x128xf32, #tpu.memory_space<vmem>>, %arg5: memref<192x128xf32, #tpu.memory_space<vmem>>) attributes {dimension_semantics = [#tpu.dimension_semantics<parallel>], iteration_bounds = array<i64: 1>, scalar_prefetch = 0 : i64, scratch_operands = 0 : i64, tpu.core_type = #tpu.core_type<tc>, window_params = [{transform_indices = @transform_0, window_bounds = array<i64: 192, 128>}, {pipeline_mode = #tpu.pipeline_mode<synchronous>, transform_indices = @transform_1, window_bounds = array<i64: 128, 128>}, {pipeline_mode = #tpu.pipeline_mode<synchronous>, transform_indices = @transform_2, window_bounds = array<i64: 1, 128>}, {pipeline_mode = #tpu.pipeline_mode<synchronous>, transform_indices = @transform_3, window_bounds = array<i64: 1, 128>}, {transform_indices = @transform_4, window_bounds = array<i64: 192, 128>}]} {
    %c0 = arith.constant 0 : index
    %c0_0 = arith.constant 0 : index
    %0 = vector.load %arg3[%c0, %c0_0] : memref<1x128xf32, #tpu.memory_space<vmem>>, vector<1x128xf32>
    %c0_1 = arith.constant 0 : index
    %c0_2 = arith.constant 0 : index
    %1 = vector.load %arg4[%c0_1, %c0_2] : memref<1x128xf32, #tpu.memory_space<vmem>>, vector<1x128xf32>
    %cst = arith.constant 3.125000e-02 : f32
    %cst_3 = arith.constant 9.99999974E-6 : f32
    %c0_i32 = arith.constant 0 : i32
    %c2_i32 = arith.constant 2 : i32
    %2 = arith.addi %c0_i32, %c2_i32 : i32
    %c1_i32 = arith.constant 1 : i32
    scf.for %arg6 = %c0_i32 to %2 step %c1_i32  : i32 {
      %c96_i32 = arith.constant 96 : i32
      %3 = arith.muli %arg6, %c96_i32 : i32
      %4 = tpu.assume_multiple %3, 8 : i32
      %5 = arith.index_cast %4 : i32 to index
      %c0_5 = arith.constant 0 : index
      %6 = vector.load %arg1[%5, %c0_5] : memref<192x128xf32, #tpu.memory_space<vmem>>, vector<96x128xf32>
      %c0_6 = arith.constant 0 : index
      %c0_7 = arith.constant 0 : index
      %7 = vector.load %arg2[%c0_6, %c0_7] : memref<128x128xf32, #tpu.memory_space<vmem>>, vector<128x128xf32>
      %cst_8 = arith.constant dense<0.000000e+00> : vector<96x128xf32>
      %8 = tpu.matmul %6, %7, %cst_8 {dimension_numbers = #tpu.dot_dimension_numbers<[1], [0], [0], [1], [0, 0, 1, 1], [], []>, precision = #tpu.contract_precision<fp32>} : vector<96x128xf32>, vector<128x128xf32>, vector<96x128xf32> -> vector<96x128xf32>
      %9 = vector.broadcast %cst : f32 to vector<96x128xf32>
      %10 = arith.mulf %8, %9 : vector<96x128xf32>
      %11 = arith.subf %6, %10 : vector<96x128xf32>
      %12 = arith.mulf %11, %11 : vector<96x128xf32>
      %cst_9 = arith.constant dense<0.000000e+00> : vector<96x128xf32>
      %13 = tpu.matmul %12, %7, %cst_9 {dimension_numbers = #tpu.dot_dimension_numbers<[1], [0], [0], [1], [0, 0, 1, 1], [], []>, precision = #tpu.contract_precision<fp32>} : vector<96x128xf32>, vector<128x128xf32>, vector<96x128xf32> -> vector<96x128xf32>
      %14 = vector.broadcast %cst : f32 to vector<96x128xf32>
      %15 = arith.mulf %13, %14 : vector<96x128xf32>
      %16 = vector.broadcast %cst_3 : f32 to vector<96x128xf32>
      %17 = arith.addf %15, %16 : vector<96x128xf32>
      %18 = math.rsqrt %17 : vector<96x128xf32>
      %19 = arith.mulf %11, %18 : vector<96x128xf32>
      %20 = vector.broadcast %0 : vector<1x128xf32> to vector<96x128xf32>
      %21 = arith.mulf %19, %20 : vector<96x128xf32>
      %22 = vector.broadcast %1 : vector<1x128xf32> to vector<96x128xf32>
      %23 = arith.addf %21, %22 : vector<96x128xf32>
      %24 = arith.index_cast %4 : i32 to index
      %c0_10 = arith.constant 0 : index
      %25 = vector.load %arg5[%24, %c0_10] : memref<192x128xf32, #tpu.memory_space<vmem>>, vector<96x128xf32>
      tpu.vector_store %arg5[%24, %c0_10], %23 {strides = array<i32>} : memref<192x128xf32, #tpu.memory_space<vmem>>, vector<96x128xf32>,
    }
    %c2_i32_4 = arith.constant 2 : i32
    return
  }
  func.func @transform_0(%arg0: i32) -> (i32, i32) {
    %c0_i32 = arith.constant 0 : i32
    %c0_i32_0 = arith.constant 0 : i32
    return %arg0, %c0_i32 : i32, i32
  }
  func.func @transform_1(%arg0: i32) -> (i32, i32) {
    %c0_i32 = arith.constant 0 : i32
    %c0_i32_0 = arith.constant 0 : i32
    %c0_i32_1 = arith.constant 0 : i32
    return %c0_i32, %c0_i32_0 : i32, i32
  }
  func.func @transform_2(%arg0: i32) -> (i32, i32) {
    %c0_i32 = arith.constant 0 : i32
    %c0_i32_0 = arith.constant 0 : i32
    %c0_i32_1 = arith.constant 0 : i32
    return %c0_i32, %c0_i32_0 : i32, i32
  }
  func.func @transform_3(%arg0: i32) -> (i32, i32) {
    %c0_i32 = arith.constant 0 : i32
    %c0_i32_0 = arith.constant 0 : i32
    %c0_i32_1 = arith.constant 0 : i32
    return %c0_i32, %c0_i32_0 : i32, i32
  }
  func.func @transform_4(%arg0: i32) -> (i32, i32) {
    %c0_i32 = arith.constant 0 : i32
    %c0_i32_0 = arith.constant 0 : i32
    return %arg0, %c0_i32 : i32, i32
  }
}

</mosaic_0001>

<llo_original>
// kernel: tpu_custom_call.1
$region0: #{tpu_custom_call.1}
  #allocation0 [shape = 'u32[]', space=smem, size = 0x4, offset = 0x4, fixed_abs, tag = 'smem constant byte address 0x4 - core index']
  #allocation1 [shape = 'u32[72,128]{1,0:T(1,128)}', space=vmem, size = 0x9000, scoped, tag = 'internal scratch']
  %s0 = inlined_call_operand.hbm [shape: f32[128,128], index: 0, kind: input, shape index: {}]
  %s1 = inlined_call_operand.hbm [shape: f32[128,128], index: 1, kind: input, shape index: {}]
  %s2 = inlined_call_operand.vmem [shape: f32[1,128], index: 2, kind: input, shape index: {}]
  %s3 = inlined_call_operand.vmem [shape: f32[1,128], index: 3, kind: input, shape index: {}]
  %s4 = inlined_call_operand.hbm [shape: f32[128,128], index: 4, kind: output, shape index: {}]
  %s5 = sld [smem:[#allocation0]]
  $region41: #{tpu_custom_call.1} parent=0
    _
  %s7 = ssub.s32 1, %s5
  %s8 = scalar_select 0, %s7, %s5
  $region1: #{tpu_custom_call.1} parent=0
    #allocation2 [shape = 'u8[98304]{0}', space=vmem, size = 0x18000, scoped, tag = 'input window, operand 0, single buffered']
    #allocation3 [shape = 's32[1]{0}', space=sflag, size = 0x4, scoped, tag = 'scoped memory for tpu_custom_call.1']
    #allocation4 [shape = 's32[1]{0}', space=sflag, size = 0x4, scoped, tag = 'scoped memory for tpu_custom_call.1']
    #allocation5 [shape = 'u8[65536]{0}', space=vmem, size = 0x10000, scoped, tag = 'input window, operand 1, single buffered']
    #allocation6 [shape = 's32[1]{0}', space=sflag, size = 0x4, scoped, tag = 'scoped memory for tpu_custom_call.1']
    #allocation7 [shape = 'u8[98304]{0}', space=vmem, size = 0x18000, scoped, tag = 'output window, operand 0, single buffered']
    %9 = vsyncpa [#allocation3], 0
    %10 = vsyncpa [#allocation6], 0
    %11 = vsyncpa [#allocation4], 0
    // Predicated region
    $region2: #{tpu_custom_call.1} parent=1 // pred_check
      _
    $region3: #{tpu_custom_call.1} parent=1 // pred_check_branch
      %13 = sbr.rel (0) target = $region5
    $region4: #{tpu_custom_call.1} parent=1 // pred_region
      %15 = vsyncadd [#allocation3], 1024
      %s16 = sshll.u32 %s0, 4
      %s17 = int_to_ptr.hbm [resolvable:$true] %s16
      %s18 = sshll.u32 [#allocation2], 4
      %s19 = int_to_ptr.vmem [resolvable:$true] %s18
      %24 = dma.hbm_to_vmem [thread:$0]  %s17, 2048, %s19, [#allocation3], 128, 128, 8
    $region5: #{tpu_custom_call.1} parent=1 // pred_fallthru
      _
    // Predicated region
    $region6: #{tpu_custom_call.1} parent=1 // pred_check
      _
    $region7: #{tpu_custom_call.1} parent=1 // pred_check_branch
      %26 = sbr.rel (0) target = $region9
    $region8: #{tpu_custom_call.1} parent=1 // pred_region
      %28 = vsyncadd [#allocation6], 0
      %s29 = sshll.u32 %s1, 4
      %s30 = int_to_ptr.hbm [resolvable:$true] %s29
      %s31 = sshll.u32 [#allocation5], 4
      %s32 = int_to_ptr.vmem [resolvable:$true] %s31
      %37 = dma.hbm_to_vmem [thread:$0]  %s30, 2048, %s32, [#allocation6], 128, 128, 8
    $region9: #{tpu_custom_call.1} parent=1 // pred_fallthru
      _
    // Predicated region
    $region10: #{tpu_custom_call.1} parent=1 // pred_check
      _
    $region11: #{tpu_custom_call.1} parent=1 // pred_check_branch
      %39 = sbr.rel (0) target = $region13
    $region12: #{tpu_custom_call.1} parent=1 // pred_region
      _
    $region13: #{tpu_custom_call.1} parent=1 // pred_fallthru
      _
    // Predicated region
    $region14: #{tpu_custom_call.1} parent=1 // pred_check
      _
    $region15: #{tpu_custom_call.1} parent=1 // pred_check_branch
      %41 = sbr.rel (0) target = $region17
    $region16: #{tpu_custom_call.1} parent=1 // pred_region
      _
    $region17: #{tpu_custom_call.1} parent=1 // pred_fallthru
      _
    // Predicated region
    $region18: #{tpu_custom_call.1} parent=1 // pred_check
      _
    $region19: #{tpu_custom_call.1} parent=1 // pred_check_branch
      %43 = sbr.rel (0) target = $region21
    $region20: #{tpu_custom_call.1} parent=1 // pred_region
      %45 = dma.done [#allocation3], 3072
    $region21: #{tpu_custom_call.1} parent=1 // pred_fallthru
      _
    // Predicated region
    $region22: #{tpu_custom_call.1} parent=1 // pred_check
      _
    $region23: #{tpu_custom_call.1} parent=1 // pred_check_branch
      %47 = sbr.rel (0) target = $region25
    $region24: #{tpu_custom_call.1} parent=1 // pred_region
      %49 = dma.done [#allocation6], 2048
    $region25: #{tpu_custom_call.1} parent=1 // pred_fallthru
      _
    %v50 = vld [vmem:[%s2] sm:$0x1]
    %v51 = vld [vmem:[%s3] sm:$0x1]
    loop: start=0, step=1, limit=2
    $region26: #{tpu_custom_call.1} parent=1 // loop_pre_header
      _
    $region27: #{tpu_custom_call.1} parent=1 // loop_header
      %s53 = sphi 0, %s57
      %p54 = scmp.ge.s32.totalorder %s53, 2
    $region28: #{tpu_custom_call.1} parent=1 // loop_header_branch
      %56 = sbr.rel (%p54) target = $region32
    $region29: #{tpu_custom_call.1} parent=1 // loop_body
      %s58 = smul.u32 %s53, 96
      %s59 = scalar_lea.vmem [#allocation2], %s58
      %v60 = vld [vmem:[%s59] sm:$0xff]
      %v61 = vld [vmem:[%s59 + $0x8] sm:$0xff]
      %v62 = vld [vmem:[%s59 + $0x10] sm:$0xff]
      %v63 = vld [vmem:[%s59 + $0x18] sm:$0xff]
      %v64 = vld [vmem:[%s59 + $0x20] sm:$0xff]
      %v65 = vld [vmem:[%s59 + $0x28] sm:$0xff]
      %v66 = vld [vmem:[%s59 + $0x30] sm:$0xff]
      %v67 = vld [vmem:[%s59 + $0x38] sm:$0xff]
      %v68 = vld [vmem:[%s59 + $0x40] sm:$0xff]
      %v69 = vld [vmem:[%s59 + $0x48] sm:$0xff]
      %v70 = vld [vmem:[%s59 + $0x50] sm:$0xff]
      %v71 = vld [vmem:[%s59 + $0x58] sm:$0xff]
      %v72 = vld [vmem:[#allocation5] sm:$0xff]
      %v73 = vld [vmem:[#allocation5 + $0x8] sm:$0xff]
      %v74 = vld [vmem:[#allocation5 + $0x10] sm:$0xff]
      %v75 = vld [vmem:[#allocation5 + $0x18] sm:$0xff]
      %v76 = vld [vmem:[#allocation5 + $0x20] sm:$0xff]
      %v77 = vld [vmem:[#allocation5 + $0x28] sm:$0xff]
      %v78 = vld [vmem:[#allocation5 + $0x30] sm:$0xff]
      %v79 = vld [vmem:[#allocation5 + $0x38] sm:$0xff]
      %v80 = vld [vmem:[#allocation5 + $0x40] sm:$0xff]
      %v81 = vld [vmem:[#allocation5 + $0x48] sm:$0xff]
      %v82 = vld [vmem:[#allocation5 + $0x50] sm:$0xff]
      %v83 = vld [vmem:[#allocation5 + $0x58] sm:$0xff]
      %v84 = vld [vmem:[#allocation5 + $0x60] sm:$0xff]
      %v85 = vld [vmem:[#allocation5 + $0x68] sm:$0xff]
      %v86 = vld [vmem:[#allocation5 + $0x70] sm:$0xff]
      %v87 = vld [vmem:[#allocation5 + $0x78] sm:$0xff]
      %v88 = vand.u32 %v87, 4294901760
      %89 = vmatpush.msra.mxu0 %v88
      %v90 = vand.u32 %v86, 4294901760
      %91 = vmatpush.msra.mxu0 %v90
      %v92 = vand.u32 %v85, 4294901760
      %93 = vmatpush.msra.mxu0 %v92
      %v94 = vand.u32 %v84, 4294901760
      %95 = vmatpush.msra.mxu0 %v94
      %v96 = vand.u32 %v83, 4294901760
      %97 = vmatpush.msra.mxu0 %v96
      %v98 = vand.u32 %v82, 4294901760
      %99 = vmatpush.msra.mxu0 %v98
      %v100 = vand.u32 %v81, 4294901760
      %101 = vmatpush.msra.mxu0 %v100
      %v102 = vand.u32 %v80, 4294901760
      %103 = vmatpush.msra.mxu0 %v102
      %v104 = vand.u32 %v79, 4294901760
      %105 = vmatpush.msra.mxu0 %v104
      %v106 = vand.u32 %v78, 4294901760
      %107 = vmatpush.msra.mxu0 %v106
      %v108 = vand.u32 %v77, 4294901760
      %109 = vmatpush.msra.mxu0 %v108
      %v110 = vand.u32 %v76, 4294901760
      %111 = vmatpush.msra.mxu0 %v110
      %v112 = vand.u32 %v75, 4294901760
      %113 = vmatpush.msra.mxu0 %v112
      %v114 = vand.u32 %v74, 4294901760
      %115 = vmatpush.msra.mxu0 %v114
      %v116 = vand.u32 %v73, 4294901760
      %117 = vmatpush.msra.mxu0 %v116
      %v118 = vand.u32 %v72, 4294901760
      %119 = vmatpush.msra.mxu0 %v118
      %v120 = vand.u32 %v60, 4294901760
      %v121 = vsub.f32 %v60, %v120
      %v122 = vand.u32 %v121, 4294901760
      %v123 = vsub.f32 %v121, %v122
      %v124 = vand.u32 %v123, 4294901760
      %125 = vmatmul.f32.gmra.mxu0 %v124
      %v126 = vpop.f32.mrf.mxu0
      %v127 = vadd.f32 0.0, %v126
      %v128 = vand.u32 %v61, 4294901760
      %v129 = vsub.f32 %v61, %v128
      %v130 = vand.u32 %v129, 4294901760
      %v131 = vsub.f32 %v129, %v130
      %v132 = vand.u32 %v131, 4294901760
      %133 = vmatmul.f32.gmra.mxu0 %v132
      %v134 = vpop.f32.mrf.mxu0
      %v135 = vadd.f32 0.0, %v134
      %v136 = vand.u32 %v62, 4294901760
      %v137 = vsub.f32 %v62, %v136
      %v138 = vand.u32 %v137, 4294901760
      %v139 = vsub.f32 %v137, %v138
      %v140 = vand.u32 %v139, 4294901760
      %141 = vmatmul.f32.gmra.mxu0 %v140
      %v142 = vpop.f32.mrf.mxu0
      %v143 = vadd.f32 0.0, %v142
      %v144 = vand.u32 %v63, 4294901760
      %v145 = vsub.f32 %v63, %v144
      %v146 = vand.u32 %v145, 4294901760
      %v147 = vsub.f32 %v145, %v146
      %v148 = vand.u32 %v147, 4294901760
      %149 = vmatmul.f32.gmra.mxu0 %v148
      %v150 = vpop.f32.mrf.mxu0
      %v151 = vadd.f32 0.0, %v150
      %v152 = vand.u32 %v64, 4294901760
      %v153 = vsub.f32 %v64, %v152
      %v154 = vand.u32 %v153, 4294901760
      %v155 = vsub.f32 %v153, %v154
      %v156 = vand.u32 %v155, 4294901760
      %157 = vmatmul.f32.gmra.mxu0 %v156
      %v158 = vpop.f32.mrf.mxu0
      %v159 = vadd.f32 0.0, %v158
      %v160 = vand.u32 %v65, 4294901760
      %v161 = vsub.f32 %v65, %v160
      %v162 = vand.u32 %v161, 4294901760
      %v163 = vsub.f32 %v161, %v162
      %v164 = vand.u32 %v163, 4294901760
      %165 = vmatmul.f32.gmra.mxu0 %v164
      %v166 = vpop.f32.mrf.mxu0
      %v167 = vadd.f32 0.0, %v166
      %v168 = vand.u32 %v66, 4294901760
      %v169 = vsub.f32 %v66, %v168
      %v170 = vand.u32 %v169, 4294901760
      %v171 = vsub.f32 %v169, %v170
      %v172 = vand.u32 %v171, 4294901760
      %173 = vmatmul.f32.gmra.mxu0 %v172
      %v174 = vpop.f32.mrf.mxu0
      %v175 = vadd.f32 0.0, %v174
      %v176 = vand.u32 %v67, 4294901760
      %v177 = vsub.f32 %v67, %v176
      %v178 = vand.u32 %v177, 4294901760
      %v179 = vsub.f32 %v177, %v178
      %v180 = vand.u32 %v179, 4294901760
      %181 = vmatmul.f32.gmra.mxu0 %v180
      %v182 = vpop.f32.mrf.mxu0
      %v183 = vadd.f32 0.0, %v182
      %v184 = vand.u32 %v68, 4294901760
      %v185 = vsub.f32 %v68, %v184
      %v186 = vand.u32 %v185, 4294901760
      %v187 = vsub.f32 %v185, %v186
      %v188 = vand.u32 %v187, 4294901760
      %189 = vmatmul.f32.gmra.mxu0 %v188
      %v190 = vpop.f32.mrf.mxu0
      %v191 = vadd.f32 0.0, %v190
      %v192 = vand.u32 %v69, 4294901760
      %v193 = vsub.f32 %v69, %v192
      %v194 = vand.u32 %v193, 4294901760
      %v195 = vsub.f32 %v193, %v194
      %v196 = vand.u32 %v195, 4294901760
      %197 = vmatmul.f32.gmra.mxu0 %v196
      %v198 = vpop.f32.mrf.mxu0
      %v199 = vadd.f32 0.0, %v198
      %v200 = vand.u32 %v70, 4294901760
      %v201 = vsub.f32 %v70, %v200
      %v202 = vand.u32 %v201, 4294901760
      %v203 = vsub.f32 %v201, %v202
      %v204 = vand.u32 %v203, 4294901760
      %205 = vmatmul.f32.gmra.mxu0 %v204
      %v206 = vpop.f32.mrf.mxu0
      %v207 = vadd.f32 0.0, %v206
      %v208 = vand.u32 %v71, 4294901760
      %v209 = vsub.f32 %v71, %v208
      %v210 = vand.u32 %v209, 4294901760
      %v211 = vsub.f32 %v209, %v210
      %v212 = vand.u32 %v211, 4294901760
      %213 = vmatmul.f32.gmra.mxu0 %v212
      %v214 = vpop.f32.mrf.mxu0
      %v215 = vadd.f32 0.0, %v214
      %216 = vdwg.mxu0
      %v217 = vand.u32 %v87, 4294901760
      %v218 = vsub.f32 %v87, %v217
      %v219 = vand.u32 %v218, 4294901760
      %v220 = vsub.f32 %v218, %v219
      %v221 = vand.u32 %v220, 4294901760
      %222 = vmatpush.msra.mxu0 %v221
      %v223 = vand.u32 %v86, 4294901760
      %v224 = vsub.f32 %v86, %v223
      %v225 = vand.u32 %v224, 4294901760
      %v226 = vsub.f32 %v224, %v225
      %v227 = vand.u32 %v226, 4294901760
      %228 = vmatpush.msra.mxu0 %v227
      %v229 = vand.u32 %v85, 4294901760
      %v230 = vsub.f32 %v85, %v229
      %v231 = vand.u32 %v230, 4294901760
      %v232 = vsub.f32 %v230, %v231
      %v233 = vand.u32 %v232, 4294901760
      %234 = vmatpush.msra.mxu0 %v233
      %v235 = vand.u32 %v84, 4294901760
      %v236 = vsub.f32 %v84, %v235
      %v237 = vand.u32 %v236, 4294901760
      %v238 = vsub.f32 %v236, %v237
      %v239 = vand.u32 %v238, 4294901760
      %240 = vmatpush.msra.mxu0 %v239
      %v241 = vand.u32 %v83, 4294901760
      %v242 = vsub.f32 %v83, %v241
      %v243 = vand.u32 %v242, 4294901760
      %v244 = vsub.f32 %v242, %v243
      %v245 = vand.u32 %v244, 4294901760
      %246 = vmatpush.msra.mxu0 %v245
      %v247 = vand.u32 %v82, 4294901760
      %v248 = vsub.f32 %v82, %v247
      %v249 = vand.u32 %v248, 4294901760
      %v250 = vsub.f32 %v248, %v249
      %v251 = vand.u32 %v250, 4294901760
      %252 = vmatpush.msra.mxu0 %v251
      %v253 = vand.u32 %v81, 4294901760
      %v254 = vsub.f32 %v81, %v253
      %v255 = vand.u32 %v254, 4294901760
      %v256 = vsub.f32 %v254, %v255
      %v257 = vand.u32 %v256, 4294901760
      %258 = vmatpush.msra.mxu0 %v257
      %v259 = vand.u32 %v80, 4294901760
      %v260 = vsub.f32 %v80, %v259
      %v261 = vand.u32 %v260, 4294901760
      %v262 = vsub.f32 %v260, %v261
      %v263 = vand.u32 %v262, 4294901760
      %264 = vmatpush.msra.mxu0 %v263
      %v265 = vand.u32 %v79, 4294901760
      %v266 = vsub.f32 %v79, %v265
      %v267 = vand.u32 %v266, 4294901760
      %v268 = vsub.f32 %v266, %v267
      %v269 = vand.u32 %v268, 4294901760
      %270 = vmatpush.msra.mxu0 %v269
      %v271 = vand.u32 %v78, 4294901760
      %v272 = vsub.f32 %v78, %v271
      %v273 = vand.u32 %v272, 4294901760
      %v274 = vsub.f32 %v272, %v273
      %v275 = vand.u32 %v274, 4294901760
      %276 = vmatpush.msra.mxu0 %v275
      %v277 = vand.u32 %v77, 4294901760
      %v278 = vsub.f32 %v77, %v277
      %v279 = vand.u32 %v278, 4294901760
      %v280 = vsub.f32 %v278, %v279
      %v281 = vand.u32 %v280, 4294901760
      %282 = vmatpush.msra.mxu0 %v281
      %v283 = vand.u32 %v76, 4294901760
      %v284 = vsub.f32 %v76, %v283
      %v285 = vand.u32 %v284, 4294901760
      %v286 = vsub.f32 %v284, %v285
      %v287 = vand.u32 %v286, 4294901760
      %288 = vmatpush.msra.mxu0 %v287
      %v289 = vand.u32 %v75, 4294901760
      %v290 = vsub.f32 %v75, %v289
      %v291 = vand.u32 %v290, 4294901760
      %v292 = vsub.f32 %v290, %v291
      %v293 = vand.u32 %v292, 4294901760
      %294 = vmatpush.msra.mxu0 %v293
      %v295 = vand.u32 %v74, 4294901760
      %v296 = vsub.f32 %v74, %v295
      %v297 = vand.u32 %v296, 4294901760
      %v298 = vsub.f32 %v296, %v297
      %v299 = vand.u32 %v298, 4294901760
      %300 = vmatpush.msra.mxu0 %v299
      %v301 = vand.u32 %v73, 4294901760
      %v302 = vsub.f32 %v73, %v301
      %v303 = vand.u32 %v302, 4294901760
      %v304 = vsub.f32 %v302, %v303
      %v305 = vand.u32 %v304, 4294901760
      %306 = vmatpush.msra.mxu0 %v305
      %v307 = vand.u32 %v72, 4294901760
      %v308 = vsub.f32 %v72, %v307
      %v309 = vand.u32 %v308, 4294901760
      %v310 = vsub.f32 %v308, %v309
      %v311 = vand.u32 %v310, 4294901760
      %312 = vmatpush.msra.mxu0 %v311
      %v313 = vand.u32 %v60, 4294901760
      %314 = vmatmul.f32.gmra.mxu0 %v313
      %v315 = vpop.f32.mrf.mxu0
      %v316 = vadd.f32 %v127, %v315
      %v317 = vand.u32 %v61, 4294901760
      %318 = vmatmul.f32.gmra.mxu0 %v317
      %v319 = vpop.f32.mrf.mxu0
      %v320 = vadd.f32 %v135, %v319
      %v321 = vand.u32 %v62, 4294901760
      %322 = vmatmul.f32.gmra.mxu0 %v321
      %v323 = vpop.f32.mrf.mxu0
      %v324 = vadd.f32 %v143, %v323
      %v325 = vand.u32 %v63, 4294901760
      %326 = vmatmul.f32.gmra.mxu0 %v325
      %v327 = vpop.f32.mrf.mxu0
      %v328 = vadd.f32 %v151, %v327
      %v329 = vand.u32 %v64, 4294901760
      %330 = vmatmul.f32.gmra.mxu0 %v329
      %v331 = vpop.f32.mrf.mxu0
      %v332 = vadd.f32 %v159, %v331
      %v333 = vand.u32 %v65, 4294901760
      %334 = vmatmul.f32.gmra.mxu0 %v333
      %v335 = vpop.f32.mrf.mxu0
      %v336 = vadd.f32 %v167, %v335
      %v337 = vand.u32 %v66, 4294901760
      %338 = vmatmul.f32.gmra.mxu0 %v337
      %v339 = vpop.f32.mrf.mxu0
      %v340 = vadd.f32 %v175, %v339
      %v341 = vand.u32 %v67, 4294901760
      %342 = vmatmul.f32.gmra.mxu0 %v341
      %v343 = vpop.f32.mrf.mxu0
      %v344 = vadd.f32 %v183, %v343
      %v345 = vand.u32 %v68, 4294901760
      %346 = vmatmul.f32.gmra.mxu0 %v345
      %v347 = vpop.f32.mrf.mxu0
      %v348 = vadd.f32 %v191, %v347
      %v349 = vand.u32 %v69, 4294901760
      %350 = vmatmul.f32.gmra.mxu0 %v349
      %v351 = vpop.f32.mrf.mxu0
      %v352 = vadd.f32 %v199, %v351
      %v353 = vand.u32 %v70, 4294901760
      %354 = vmatmul.f32.gmra.mxu0 %v353
      %v355 = vpop.f32.mrf.mxu0
      %v356 = vadd.f32 %v207, %v355
      %v357 = vand.u32 %v71, 4294901760
      %358 = vmatmul.f32.gmra.mxu0 %v357
      %v359 = vpop.f32.mrf.mxu0
      %v360 = vadd.f32 %v215, %v359
      %361 = vdwg.mxu0
      %v362 = vand.u32 %v87, 4294901760
      %v363 = vsub.f32 %v87, %v362
      %364 = vmatpush.msra.mxu0 %v363
      %v365 = vand.u32 %v86, 4294901760
      %v366 = vsub.f32 %v86, %v365
      %367 = vmatpush.msra.mxu0 %v366
      %v368 = vand.u32 %v85, 4294901760
      %v369 = vsub.f32 %v85, %v368
      %370 = vmatpush.msra.mxu0 %v369
      %v371 = vand.u32 %v84, 4294901760
      %v372 = vsub.f32 %v84, %v371
      %373 = vmatpush.msra.mxu0 %v372
      %v374 = vand.u32 %v83, 4294901760
      %v375 = vsub.f32 %v83, %v374
      %376 = vmatpush.msra.mxu0 %v375
      %v377 = vand.u32 %v82, 4294901760
      %v378 = vsub.f32 %v82, %v377
      %379 = vmatpush.msra.mxu0 %v378
      %v380 = vand.u32 %v81, 4294901760
      %v381 = vsub.f32 %v81, %v380
      %382 = vmatpush.msra.mxu0 %v381
      %v383 = vand.u32 %v80, 4294901760
      %v384 = vsub.f32 %v80, %v383
      %385 = vmatpush.msra.mxu0 %v384
      %v386 = vand.u32 %v79, 4294901760
      %v387 = vsub.f32 %v79, %v386
      %388 = vmatpush.msra.mxu0 %v387
      %v389 = vand.u32 %v78, 4294901760
      %v390 = vsub.f32 %v78, %v389
      %391 = vmatpush.msra.mxu0 %v390
      %v392 = vand.u32 %v77, 4294901760
      %v393 = vsub.f32 %v77, %v392
      %394 = vmatpush.msra.mxu0 %v393
      %v395 = vand.u32 %v76, 4294901760
      %v396 = vsub.f32 %v76, %v395
      %397 = vmatpush.msra.mxu0 %v396
      %v398 = vand.u32 %v75, 4294901760
      %v399 = vsub.f32 %v75, %v398
      %400 = vmatpush.msra.mxu0 %v399
      %v401 = vand.u32 %v74, 4294901760
      %v402 = vsub.f32 %v74, %v401
      %403 = vmatpush.msra.mxu0 %v402
      %v404 = vand.u32 %v73, 4294901760
      %v405 = vsub.f32 %v73, %v404
      %406 = vmatpush.msra.mxu0 %v405
      %v407 = vand.u32 %v72, 4294901760
      %v408 = vsub.f32 %v72, %v407
      %409 = vmatpush.msra.mxu0 %v408
      %v410 = vand.u32 %v60, 4294901760
      %v411 = vsub.f32 %v60, %v410
      %412 = vmatmul.f32.gmra.mxu0 %v411
      %v413 = vpop.f32.mrf.mxu0
      %v414 = vadd.f32 %v316, %v413
      %v415 = vand.u32 %v61, 4294901760
      %v416 = vsub.f32 %v61, %v415
      %417 = vmatmul.f32.gmra.mxu0 %v416
      %v418 = vpop.f32.mrf.mxu0
      %v419 = vadd.f32 %v320, %v418
      %v420 = vand.u32 %v62, 4294901760
      %v421 = vsub.f32 %v62, %v420
      %422 = vmatmul.f32.gmra.mxu0 %v421
      %v423 = vpop.f32.mrf.mxu0
      %v424 = vadd.f32 %v324, %v423
      %v425 = vand.u32 %v63, 4294901760
      %v426 = vsub.f32 %v63, %v425
      %427 = vmatmul.f32.gmra.mxu0 %v426
      %v428 = vpop.f32.mrf.mxu0
      %v429 = vadd.f32 %v328, %v428
      %v430 = vand.u32 %v64, 4294901760
      %v431 = vsub.f32 %v64, %v430
      %432 = vmatmul.f32.gmra.mxu0 %v431
      %v433 = vpop.f32.mrf.mxu0
      %v434 = vadd.f32 %v332, %v433
      %v435 = vand.u32 %v65, 4294901760
      %v436 = vsub.f32 %v65, %v435
      %437 = vmatmul.f32.gmra.mxu0 %v436
      %v438 = vpop.f32.mrf.mxu0
      %v439 = vadd.f32 %v336, %v438
      %v440 = vand.u32 %v66, 4294901760
      %v441 = vsub.f32 %v66, %v440
      %442 = vmatmul.f32.gmra.mxu0 %v441
      %v443 = vpop.f32.mrf.mxu0
      %v444 = vadd.f32 %v340, %v443
      %v445 = vand.u32 %v67, 4294901760
      %v446 = vsub.f32 %v67, %v445
      %447 = vmatmul.f32.gmra.mxu0 %v446
      %v448 = vpop.f32.mrf.mxu0
      %v449 = vadd.f32 %v344, %v448
      %v450 = vand.u32 %v68, 4294901760
      %v451 = vsub.f32 %v68, %v450
      %452 = vmatmul.f32.gmra.mxu0 %v451
      %v453 = vpop.f32.mrf.mxu0
      %v454 = vadd.f32 %v348, %v453
      %v455 = vand.u32 %v69, 4294901760
      %v456 = vsub.f32 %v69, %v455
      %457 = vmatmul.f32.gmra.mxu0 %v456
      %v458 = vpop.f32.mrf.mxu0
      %v459 = vadd.f32 %v352, %v458
      %v460 = vand.u32 %v70, 4294901760
      %v461 = vsub.f32 %v70, %v460
      %462 = vmatmul.f32.gmra.mxu0 %v461
      %v463 = vpop.f32.mrf.mxu0
      %v464 = vadd.f32 %v356, %v463
      %v465 = vand.u32 %v71, 4294901760
      %v466 = vsub.f32 %v71, %v465
      %467 = vmatmul.f32.gmra.mxu0 %v466
      %v468 = vpop.f32.mrf.mxu0
      %v469 = vadd.f32 %v360, %v468
      %470 = vdwg.mxu0
      %v471 = vand.u32 %v87, 4294901760
      %472 = vmatpush.msra.mxu0 %v471
      %v473 = vand.u32 %v86, 4294901760
      %474 = vmatpush.msra.mxu0 %v473
      %v475 = vand.u32 %v85, 4294901760
      %476 = vmatpush.msra.mxu0 %v475
      %v477 = vand.u32 %v84, 4294901760
      %478 = vmatpush.msra.mxu0 %v477
      %v479 = vand.u32 %v83, 4294901760
      %480 = vmatpush.msra.mxu0 %v479
      %v481 = vand.u32 %v82, 4294901760
      %482 = vmatpush.msra.mxu0 %v481
      %v483 = vand.u32 %v81, 4294901760
      %484 = vmatpush.msra.mxu0 %v483
      %v485 = vand.u32 %v80, 4294901760
      %486 = vmatpush.msra.mxu0 %v485
      %v487 = vand.u32 %v79, 4294901760
      %488 = vmatpush.msra.mxu0 %v487
      %v489 = vand.u32 %v78, 4294901760
      %490 = vmatpush.msra.mxu0 %v489
      %v491 = vand.u32 %v77, 4294901760
      %492 = vmatpush.msra.mxu0 %v491
      %v493 = vand.u32 %v76, 4294901760
      %494 = vmatpush.msra.mxu0 %v493
      %v495 = vand.u32 %v75, 4294901760
      %496 = vmatpush.msra.mxu0 %v495
      %v497 = vand.u32 %v74, 4294901760
      %498 = vmatpush.msra.mxu0 %v497
      %v499 = vand.u32 %v73, 4294901760
      %500 = vmatpush.msra.mxu0 %v499
      %v501 = vand.u32 %v72, 4294901760
      %502 = vmatpush.msra.mxu0 %v501
      %v503 = vand.u32 %v60, 4294901760
      %v504 = vsub.f32 %v60, %v503
      %v505 = vand.u32 %v504, 4294901760
      %506 = vmatmul.f32.gmra.mxu0 %v505
      %v507 = vpop.f32.mrf.mxu0
      %v508 = vadd.f32 %v414, %v507
      %v509 = vand.u32 %v61, 4294901760
      %v510 = vsub.f32 %v61, %v509
      %v511 = vand.u32 %v510, 4294901760
      %512 = vmatmul.f32.gmra.mxu0 %v511
      %v513 = vpop.f32.mrf.mxu0
      %v514 = vadd.f32 %v419, %v513
      %v515 = vand.u32 %v62, 4294901760
      %v516 = vsub.f32 %v62, %v515
      %v517 = vand.u32 %v516, 4294901760
      %518 = vmatmul.f32.gmra.mxu0 %v517
      %v519 = vpop.f32.mrf.mxu0
      %v520 = vadd.f32 %v424, %v519
      %v521 = vand.u32 %v63, 4294901760
      %v522 = vsub.f32 %v63, %v521
      %v523 = vand.u32 %v522, 4294901760
      %524 = vmatmul.f32.gmra.mxu0 %v523
      %v525 = vpop.f32.mrf.mxu0
      %v526 = vadd.f32 %v429, %v525
      %v527 = vand.u32 %v64, 4294901760
      %v528 = vsub.f32 %v64, %v527
      %v529 = vand.u32 %v528, 4294901760
      %530 = vmatmul.f32.gmra.mxu0 %v529
      %v531 = vpop.f32.mrf.mxu0
      %v532 = vadd.f32 %v434, %v531
      %v533 = vand.u32 %v65, 4294901760
      %v534 = vsub.f32 %v65, %v533
      %v535 = vand.u32 %v534, 4294901760
      %536 = vmatmul.f32.gmra.mxu0 %v535
      %v537 = vpop.f32.mrf.mxu0
      %v538 = vadd.f32 %v439, %v537
      %v539 = vand.u32 %v66, 4294901760
      %v540 = vsub.f32 %v66, %v539
      %v541 = vand.u32 %v540, 4294901760
      %542 = vmatmul.f32.gmra.mxu0 %v541
      %v543 = vpop.f32.mrf.mxu0
      %v544 = vadd.f32 %v444, %v543
      %v545 = vand.u32 %v67, 4294901760
      %v546 = vsub.f32 %v67, %v545
      %v547 = vand.u32 %v546, 4294901760
      %548 = vmatmul.f32.gmra.mxu0 %v547
      %v549 = vpop.f32.mrf.mxu0
      %v550 = vadd.f32 %v449, %v549
      %v551 = vand.u32 %v68, 4294901760
      %v552 = vsub.f32 %v68, %v551
      %v553 = vand.u32 %v552, 4294901760
      %554 = vmatmul.f32.gmra.mxu0 %v553
      %v555 = vpop.f32.mrf.mxu0
      %v556 = vadd.f32 %v454, %v555
      %v557 = vand.u32 %v69, 4294901760
      %v558 = vsub.f32 %v69, %v557
      %v559 = vand.u32 %v558, 4294901760
      %560 = vmatmul.f32.gmra.mxu0 %v559
      %v561 = vpop.f32.mrf.mxu0
      %v562 = vadd.f32 %v459, %v561
      %v563 = vand.u32 %v70, 4294901760
      %v564 = vsub.f32 %v70, %v563
      %v565 = vand.u32 %v564, 4294901760
      %566 = vmatmul.f32.gmra.mxu0 %v565
      %v567 = vpop.f32.mrf.mxu0
      %v568 = vadd.f32 %v464, %v567
      %v569 = vand.u32 %v71, 4294901760
      %v570 = vsub.f32 %v71, %v569
      %v571 = vand.u32 %v570, 4294901760
      %572 = vmatmul.f32.gmra.mxu0 %v571
      %v573 = vpop.f32.mrf.mxu0
      %v574 = vadd.f32 %v469, %v573
      %575 = vdwg.mxu0
      %v576 = vand.u32 %v87, 4294901760
      %v577 = vsub.f32 %v87, %v576
      %v578 = vand.u32 %v577, 4294901760
      %579 = vmatpush.msra.mxu0 %v578
      %v580 = vand.u32 %v86, 4294901760
      %v581 = vsub.f32 %v86, %v580
      %v582 = vand.u32 %v581, 4294901760
      %583 = vmatpush.msra.mxu0 %v582
      %v584 = vand.u32 %v85, 4294901760
      %v585 = vsub.f32 %v85, %v584
      %v586 = vand.u32 %v585, 4294901760
      %587 = vmatpush.msra.mxu0 %v586
      %v588 = vand.u32 %v84, 4294901760
      %v589 = vsub.f32 %v84, %v588
      %v590 = vand.u32 %v589, 4294901760
      %591 = vmatpush.msra.mxu0 %v590
      %v592 = vand.u32 %v83, 4294901760
      %v593 = vsub.f32 %v83, %v592
      %v594 = vand.u32 %v593, 4294901760
      %595 = vmatpush.msra.mxu0 %v594
      %v596 = vand.u32 %v82, 4294901760
      %v597 = vsub.f32 %v82, %v596
      %v598 = vand.u32 %v597, 4294901760
      %599 = vmatpush.msra.mxu0 %v598
      %v600 = vand.u32 %v81, 4294901760
      %v601 = vsub.f32 %v81, %v600
      %v602 = vand.u32 %v601, 4294901760
      %603 = vmatpush.msra.mxu0 %v602
      %v604 = vand.u32 %v80, 4294901760
      %v605 = vsub.f32 %v80, %v604
      %v606 = vand.u32 %v605, 4294901760
      %607 = vmatpush.msra.mxu0 %v606
      %v608 = vand.u32 %v79, 4294901760
      %v609 = vsub.f32 %v79, %v608
      %v610 = vand.u32 %v609, 4294901760
      %611 = vmatpush.msra.mxu0 %v610
      %v612 = vand.u32 %v78, 4294901760
      %v613 = vsub.f32 %v78, %v612
      %v614 = vand.u32 %v613, 4294901760
      %615 = vmatpush.msra.mxu0 %v614
      %v616 = vand.u32 %v77, 4294901760
      %v617 = vsub.f32 %v77, %v616
      %v618 = vand.u32 %v617, 4294901760
      %619 = vmatpush.msra.mxu0 %v618
      %v620 = vand.u32 %v76, 4294901760
      %v621 = vsub.f32 %v76, %v620
      %v622 = vand.u32 %v621, 4294901760
      %623 = vmatpush.msra.mxu0 %v622
      %v624 = vand.u32 %v75, 4294901760
      %v625 = vsub.f32 %v75, %v624
      %v626 = vand.u32 %v625, 4294901760
      %627 = vmatpush.msra.mxu0 %v626
      %v628 = vand.u32 %v74, 4294901760
      %v629 = vsub.f32 %v74, %v628
      %v630 = vand.u32 %v629, 4294901760
      %631 = vmatpush.msra.mxu0 %v630
      %v632 = vand.u32 %v73, 4294901760
      %v633 = vsub.f32 %v73, %v632
      %v634 = vand.u32 %v633, 4294901760
      %635 = vmatpush.msra.mxu0 %v634
      %v636 = vand.u32 %v72, 4294901760
      %v637 = vsub.f32 %v72, %v636
      %v638 = vand.u32 %v637, 4294901760
      %639 = vmatpush.msra.mxu0 %v638
      %v640 = vand.u32 %v60, 4294901760
      %641 = vmatmul.f32.gmra.mxu0 %v640
      %v642 = vpop.f32.mrf.mxu0
      %v643 = vadd.f32 %v508, %v642
      %v644 = vand.u32 %v61, 4294901760
      %645 = vmatmul.f32.gmra.mxu0 %v644
      %v646 = vpop.f32.mrf.mxu0
      %v647 = vadd.f32 %v514, %v646
      %v648 = vand.u32 %v62, 4294901760
      %649 = vmatmul.f32.gmra.mxu0 %v648
      %v650 = vpop.f32.mrf.mxu0
      %v651 = vadd.f32 %v520, %v650
      %v652 = vand.u32 %v63, 4294901760
      %653 = vmatmul.f32.gmra.mxu0 %v652
      %v654 = vpop.f32.mrf.mxu0
      %v655 = vadd.f32 %v526, %v654
      %v656 = vand.u32 %v64, 4294901760
      %657 = vmatmul.f32.gmra.mxu0 %v656
      %v658 = vpop.f32.mrf.mxu0
      %v659 = vadd.f32 %v532, %v658
      %v660 = vand.u32 %v65, 4294901760
      %661 = vmatmul.f32.gmra.mxu0 %v660
      %v662 = vpop.f32.mrf.mxu0
      %v663 = vadd.f32 %v538, %v662
      %v664 = vand.u32 %v66, 4294901760
      %665 = vmatmul.f32.gmra.mxu0 %v664
      %v666 = vpop.f32.mrf.mxu0
      %v667 = vadd.f32 %v544, %v666
      %v668 = vand.u32 %v67, 4294901760
      %669 = vmatmul.f32.gmra.mxu0 %v668
      %v670 = vpop.f32.mrf.mxu0
      %v671 = vadd.f32 %v550, %v670
      %v672 = vand.u32 %v68, 4294901760
      %673 = vmatmul.f32.gmra.mxu0 %v672
      %v674 = vpop.f32.mrf.mxu0
      %v675 = vadd.f32 %v556, %v674
      %v676 = vand.u32 %v69, 4294901760
      %677 = vmatmul.f32.gmra.mxu0 %v676
      %v678 = vpop.f32.mrf.mxu0
      %v679 = vadd.f32 %v562, %v678
      %v680 = vand.u32 %v70, 4294901760
      %681 = vmatmul.f32.gmra.mxu0 %v680
      %v682 = vpop.f32.mrf.mxu0
      %v683 = vadd.f32 %v568, %v682
      %v684 = vand.u32 %v71, 4294901760
      %685 = vmatmul.f32.gmra.mxu0 %v684
      %v686 = vpop.f32.mrf.mxu0
      %v687 = vadd.f32 %v574, %v686
      %688 = vdwg.mxu0
      %v689 = vand.u32 %v87, 4294901760
      %690 = vmatpush.msra.mxu0 %v689
      %v691 = vand.u32 %v86, 4294901760
      %692 = vmatpush.msra.mxu0 %v691
      %v693 = vand.u32 %v85, 4294901760
      %694 = vmatpush.msra.mxu0 %v693
      %v695 = vand.u32 %v84, 4294901760
      %696 = vmatpush.msra.mxu0 %v695
      %v697 = vand.u32 %v83, 4294901760
      %698 = vmatpush.msra.mxu0 %v697
      %v699 = vand.u32 %v82, 4294901760
      %700 = vmatpush.msra.mxu0 %v699
      %v701 = vand.u32 %v81, 4294901760
      %702 = vmatpush.msra.mxu0 %v701
      %v703 = vand.u32 %v80, 4294901760
      %704 = vmatpush.msra.mxu0 %v703
      %v705 = vand.u32 %v79, 4294901760
      %706 = vmatpush.msra.mxu0 %v705
      %v707 = vand.u32 %v78, 4294901760
      %708 = vmatpush.msra.mxu0 %v707
      %v709 = vand.u32 %v77, 4294901760
      %710 = vmatpush.msra.mxu0 %v709
      %v711 = vand.u32 %v76, 4294901760
      %712 = vmatpush.msra.mxu0 %v711
      %v713 = vand.u32 %v75, 4294901760
      %714 = vmatpush.msra.mxu0 %v713
      %v715 = vand.u32 %v74, 4294901760
      %716 = vmatpush.msra.mxu0 %v715
      %v717 = vand.u32 %v73, 4294901760
      %718 = vmatpush.msra.mxu0 %v717
      %v719 = vand.u32 %v72, 4294901760
      %720 = vmatpush.msra.mxu0 %v719
      %v721 = vand.u32 %v60, 4294901760
      %722 = vmatmul.f32.gmra.mxu0 %v721
      %v723 = vpop.f32.mrf.mxu0
      %v724 = vadd.f32 %v643, %v723
      %v725 = vand.u32 %v61, 4294901760
      %726 = vmatmul.f32.gmra.mxu0 %v725
      %v727 = vpop.f32.mrf.mxu0
      %v728 = vadd.f32 %v647, %v727
      %v729 = vand.u32 %v62, 4294901760
      %730 = vmatmul.f32.gmra.mxu0 %v729
      %v731 = vpop.f32.mrf.mxu0
      %v732 = vadd.f32 %v651, %v731
      %v733 = vand.u32 %v63, 4294901760
      %734 = vmatmul.f32.gmra.mxu0 %v733
      %v735 = vpop.f32.mrf.mxu0
      %v736 = vadd.f32 %v655, %v735
      %v737 = vand.u32 %v64, 4294901760
      %738 = vmatmul.f32.gmra.mxu0 %v737
      %v739 = vpop.f32.mrf.mxu0
      %v740 = vadd.f32 %v659, %v739
      %v741 = vand.u32 %v65, 4294901760
      %742 = vmatmul.f32.gmra.mxu0 %v741
      %v743 = vpop.f32.mrf.mxu0
      %v744 = vadd.f32 %v663, %v743
      %v745 = vand.u32 %v66, 4294901760
      %746 = vmatmul.f32.gmra.mxu0 %v745
      %v747 = vpop.f32.mrf.mxu0
      %v748 = vadd.f32 %v667, %v747
      %v749 = vand.u32 %v67, 4294901760
      %750 = vmatmul.f32.gmra.mxu0 %v749
      %v751 = vpop.f32.mrf.mxu0
      %v752 = vadd.f32 %v671, %v751
      %v753 = vand.u32 %v68, 4294901760
      %754 = vmatmul.f32.gmra.mxu0 %v753
      %v755 = vpop.f32.mrf.mxu0
      %v756 = vadd.f32 %v675, %v755
      %v757 = vand.u32 %v69, 4294901760
      %758 = vmatmul.f32.gmra.mxu0 %v757
      %v759 = vpop.f32.mrf.mxu0
      %v760 = vadd.f32 %v679, %v759
      %v761 = vand.u32 %v70, 4294901760
      %762 = vmatmul.f32.gmra.mxu0 %v761
      %v763 = vpop.f32.mrf.mxu0
      %v764 = vadd.f32 %v683, %v763
      %v765 = vand.u32 %v71, 4294901760
      %766 = vmatmul.f32.gmra.mxu0 %v765
      %v767 = vpop.f32.mrf.mxu0
      %v768 = vadd.f32 %v687, %v767
      %769 = vdwg.mxu0
      %v770 = vmul.f32 %v724, 0.03125
      %v771 = vmul.f32 %v728, 0.03125
      %v772 = vmul.f32 %v732, 0.03125
      %v773 = vmul.f32 %v736, 0.03125
      %v774 = vmul.f32 %v740, 0.03125
      %v775 = vmul.f32 %v744, 0.03125
      %v776 = vmul.f32 %v748, 0.03125
      %v777 = vmul.f32 %v752, 0.03125
      %v778 = vmul.f32 %v756, 0.03125
      %v779 = vmul.f32 %v760, 0.03125
      %v780 = vmul.f32 %v764, 0.03125
      %v781 = vmul.f32 %v768, 0.03125
      %v782 = vsub.f32 %v60, %v770
      %v783 = vsub.f32 %v61, %v771
      %v784 = vsub.f32 %v62, %v772
      %v785 = vsub.f32 %v63, %v773
      %v786 = vsub.f32 %v64, %v774
      %v787 = vsub.f32 %v65, %v775
      %v788 = vsub.f32 %v66, %v776
      %v789 = vsub.f32 %v67, %v777
      %v790 = vsub.f32 %v68, %v778
      %v791 = vsub.f32 %v69, %v779
      %v792 = vsub.f32 %v70, %v780
      %v793 = vsub.f32 %v71, %v781
      %v794 = vmul.f32 %v782, %v782
      %v795 = vmul.f32 %v783, %v783
      %v796 = vmul.f32 %v784, %v784
      %v797 = vmul.f32 %v785, %v785
      %v798 = vmul.f32 %v786, %v786
      %v799 = vmul.f32 %v787, %v787
      %v800 = vmul.f32 %v788, %v788
      %v801 = vmul.f32 %v789, %v789
      %v802 = vmul.f32 %v790, %v790
      %v803 = vmul.f32 %v791, %v791
      %v804 = vmul.f32 %v792, %v792
      %v805 = vmul.f32 %v793, %v793
      %v806 = vand.u32 %v87, 4294901760
      %807 = vmatpush.msra.mxu0 %v806
      %v808 = vand.u32 %v86, 4294901760
      %809 = vmatpush.msra.mxu0 %v808
      %v810 = vand.u32 %v85, 4294901760
      %811 = vmatpush.msra.mxu0 %v810
      %v812 = vand.u32 %v84, 4294901760
      %813 = vmatpush.msra.mxu0 %v812
      %v814 = vand.u32 %v83, 4294901760
      %815 = vmatpush.msra.mxu0 %v814
      %v816 = vand.u32 %v82, 4294901760
      %817 = vmatpush.msra.mxu0 %v816
      %v818 = vand.u32 %v81, 4294901760
      %819 = vmatpush.msra.mxu0 %v818
      %v820 = vand.u32 %v80, 4294901760
      %821 = vmatpush.msra.mxu0 %v820
      %v822 = vand.u32 %v79, 4294901760
      %823 = vmatpush.msra.mxu0 %v822
      %v824 = vand.u32 %v78, 4294901760
      %825 = vmatpush.msra.mxu0 %v824
      %v826 = vand.u32 %v77, 4294901760
      %827 = vmatpush.msra.mxu0 %v826
      %v828 = vand.u32 %v76, 4294901760
      %829 = vmatpush.msra.mxu0 %v828
      %v830 = vand.u32 %v75, 4294901760
      %831 = vmatpush.msra.mxu0 %v830
      %v832 = vand.u32 %v74, 4294901760
      %833 = vmatpush.msra.mxu0 %v832
      %v834 = vand.u32 %v73, 4294901760
      %835 = vmatpush.msra.mxu0 %v834
      %v836 = vand.u32 %v72, 4294901760
      %837 = vmatpush.msra.mxu0 %v836
      %v838 = vand.u32 %v794, 4294901760
      %v839 = vsub.f32 %v794, %v838
      %v840 = vand.u32 %v839, 4294901760
      %v841 = vsub.f32 %v839, %v840
      %v842 = vand.u32 %v841, 4294901760
      %843 = vmatmul.f32.gmra.mxu0 %v842
      %v844 = vpop.f32.mrf.mxu0
      %v845 = vadd.f32 0.0, %v844
      %v846 = vand.u32 %v795, 4294901760
      %v847 = vsub.f32 %v795, %v846
      %v848 = vand.u32 %v847, 4294901760
      %v849 = vsub.f32 %v847, %v848
      %v850 = vand.u32 %v849, 4294901760
      %851 = vmatmul.f32.gmra.mxu0 %v850
      %v852 = vpop.f32.mrf.mxu0
      %v853 = vadd.f32 0.0, %v852
      %v854 = vand.u32 %v796, 4294901760
      %v855 = vsub.f32 %v796, %v854
      %v856 = vand.u32 %v855, 4294901760
      %v857 = vsub.f32 %v855, %v856
      %v858 = vand.u32 %v857, 4294901760
      %859 = vmatmul.f32.gmra.mxu0 %v858
      %v860 = vpop.f32.mrf.mxu0
      %v861 = vadd.f32 0.0, %v860
      %v862 = vand.u32 %v797, 4294901760
      %v863 = vsub.f32 %v797, %v862
      %v864 = vand.u32 %v863, 4294901760
      %v865 = vsub.f32 %v863, %v864
      %v866 = vand.u32 %v865, 4294901760
      %867 = vmatmul.f32.gmra.mxu0 %v866
      %v868 = vpop.f32.mrf.mxu0
      %v869 = vadd.f32 0.0, %v868
      %v870 = vand.u32 %v798, 4294901760
      %v871 = vsub.f32 %v798, %v870
      %v872 = vand.u32 %v871, 4294901760
      %v873 = vsub.f32 %v871, %v872
      %v874 = vand.u32 %v873, 4294901760
      %875 = vmatmul.f32.gmra.mxu0 %v874
      %v876 = vpop.f32.mrf.mxu0
      %v877 = vadd.f32 0.0, %v876
      %v878 = vand.u32 %v799, 4294901760
      %v879 = vsub.f32 %v799, %v878
      %v880 = vand.u32 %v879, 4294901760
      %v881 = vsub.f32 %v879, %v880
      %v882 = vand.u32 %v881, 4294901760
      %883 = vmatmul.f32.gmra.mxu0 %v882
      %v884 = vpop.f32.mrf.mxu0
      %v885 = vadd.f32 0.0, %v884
      %v886 = vand.u32 %v800, 4294901760
      %v887 = vsub.f32 %v800, %v886
      %v888 = vand.u32 %v887, 4294901760
      %v889 = vsub.f32 %v887, %v888
      %v890 = vand.u32 %v889, 4294901760
      %891 = vmatmul.f32.gmra.mxu0 %v890
      %v892 = vpop.f32.mrf.mxu0
      %v893 = vadd.f32 0.0, %v892
      %v894 = vand.u32 %v801, 4294901760
      %v895 = vsub.f32 %v801, %v894
      %v896 = vand.u32 %v895, 4294901760
      %v897 = vsub.f32 %v895, %v896
      %v898 = vand.u32 %v897, 4294901760
      %899 = vmatmul.f32.gmra.mxu0 %v898
      %v900 = vpop.f32.mrf.mxu0
      %v901 = vadd.f32 0.0, %v900
      %v902 = vand.u32 %v802, 4294901760
      %v903 = vsub.f32 %v802, %v902
      %v904 = vand.u32 %v903, 4294901760
      %v905 = vsub.f32 %v903, %v904
      %v906 = vand.u32 %v905, 4294901760
      %907 = vmatmul.f32.gmra.mxu0 %v906
      %v908 = vpop.f32.mrf.mxu0
      %v909 = vadd.f32 0.0, %v908
      %v910 = vand.u32 %v803, 4294901760
      %v911 = vsub.f32 %v803, %v910
      %v912 = vand.u32 %v911, 4294901760
      %v913 = vsub.f32 %v911, %v912
      %v914 = vand.u32 %v913, 4294901760
      %915 = vmatmul.f32.gmra.mxu0 %v914
      %v916 = vpop.f32.mrf.mxu0
      %v917 = vadd.f32 0.0, %v916
      %v918 = vand.u32 %v804, 4294901760
      %v919 = vsub.f32 %v804, %v918
      %v920 = vand.u32 %v919, 4294901760
      %v921 = vsub.f32 %v919, %v920
      %v922 = vand.u32 %v921, 4294901760
      %923 = vmatmul.f32.gmra.mxu0 %v922
      %v924 = vpop.f32.mrf.mxu0
      %v925 = vadd.f32 0.0, %v924
      %v926 = vand.u32 %v805, 4294901760
      %v927 = vsub.f32 %v805, %v926
      %v928 = vand.u32 %v927, 4294901760
      %v929 = vsub.f32 %v927, %v928
      %v930 = vand.u32 %v929, 4294901760
      %931 = vmatmul.f32.gmra.mxu0 %v930
      %v932 = vpop.f32.mrf.mxu0
      %v933 = vadd.f32 0.0, %v932
      %934 = vdwg.mxu0
      %v935 = vand.u32 %v87, 4294901760
      %v936 = vsub.f32 %v87, %v935
      %v937 = vand.u32 %v936, 4294901760
      %v938 = vsub.f32 %v936, %v937
      %v939 = vand.u32 %v938, 4294901760
      %940 = vmatpush.msra.mxu0 %v939
      %v941 = vand.u32 %v86, 4294901760
      %v942 = vsub.f32 %v86, %v941
      %v943 = vand.u32 %v942, 4294901760
      %v944 = vsub.f32 %v942, %v943
      %v945 = vand.u32 %v944, 4294901760
      %946 = vmatpush.msra.mxu0 %v945
      %v947 = vand.u32 %v85, 4294901760
      %v948 = vsub.f32 %v85, %v947
      %v949 = vand.u32 %v948, 4294901760
      %v950 = vsub.f32 %v948, %v949
      %v951 = vand.u32 %v950, 4294901760
      %952 = vmatpush.msra.mxu0 %v951
      %v953 = vand.u32 %v84, 4294901760
      %v954 = vsub.f32 %v84, %v953
      %v955 = vand.u32 %v954, 4294901760
      %v956 = vsub.f32 %v954, %v955
      %v957 = vand.u32 %v956, 4294901760
      %958 = vmatpush.msra.mxu0 %v957
      %v959 = vand.u32 %v83, 4294901760
      %v960 = vsub.f32 %v83, %v959
      %v961 = vand.u32 %v960, 4294901760
      %v962 = vsub.f32 %v960, %v961
      %v963 = vand.u32 %v962, 4294901760
      %964 = vmatpush.msra.mxu0 %v963
      %v965 = vand.u32 %v82, 4294901760
      %v966 = vsub.f32 %v82, %v965
      %v967 = vand.u32 %v966, 4294901760
      %v968 = vsub.f32 %v966, %v967
      %v969 = vand.u32 %v968, 4294901760
      %970 = vmatpush.msra.mxu0 %v969
      %v971 = vand.u32 %v81, 4294901760
      %v972 = vsub.f32 %v81, %v971
      %v973 = vand.u32 %v972, 4294901760
      %v974 = vsub.f32 %v972, %v973
      %v975 = vand.u32 %v974, 4294901760
      %976 = vmatpush.msra.mxu0 %v975
      %v977 = vand.u32 %v80, 4294901760
      %v978 = vsub.f32 %v80, %v977
      %v979 = vand.u32 %v978, 4294901760
      %v980 = vsub.f32 %v978, %v979
      %v981 = vand.u32 %v980, 4294901760
      %982 = vmatpush.msra.mxu0 %v981
      %v983 = vand.u32 %v79, 4294901760
      %v984 = vsub.f32 %v79, %v983
      %v985 = vand.u32 %v984, 4294901760
      %v986 = vsub.f32 %v984, %v985
      %v987 = vand.u32 %v986, 4294901760
      %988 = vmatpush.msra.mxu0 %v987
      %v989 = vand.u32 %v78, 4294901760
      %v990 = vsub.f32 %v78, %v989
      %v991 = vand.u32 %v990, 4294901760
      %v992 = vsub.f32 %v990, %v991
      %v993 = vand.u32 %v992, 4294901760
      %994 = vmatpush.msra.mxu0 %v993
      %v995 = vand.u32 %v77, 4294901760
      %v996 = vsub.f32 %v77, %v995
      %v997 = vand.u32 %v996, 4294901760
      %v998 = vsub.f32 %v996, %v997
      %v999 = vand.u32 %v998, 4294901760
      %1000 = vmatpush.msra.mxu0 %v999
      %v1001 = vand.u32 %v76, 4294901760
      %v1002 = vsub.f32 %v76, %v1001
      %v1003 = vand.u32 %v1002, 4294901760
      %v1004 = vsub.f32 %v1002, %v1003
      %v1005 = vand.u32 %v1004, 4294901760
      %1006 = vmatpush.msra.mxu0 %v1005
      %v1007 = vand.u32 %v75, 4294901760
      %v1008 = vsub.f32 %v75, %v1007
      %v1009 = vand.u32 %v1008, 4294901760
      %v1010 = vsub.f32 %v1008, %v1009
      %v1011 = vand.u32 %v1010, 4294901760
      %1012 = vmatpush.msra.mxu0 %v1011
      %v1013 = vand.u32 %v74, 4294901760
      %v1014 = vsub.f32 %v74, %v1013
      %v1015 = vand.u32 %v1014, 4294901760
      %v1016 = vsub.f32 %v1014, %v1015
      %v1017 = vand.u32 %v1016, 4294901760
      %1018 = vmatpush.msra.mxu0 %v1017
      %v1019 = vand.u32 %v73, 4294901760
      %v1020 = vsub.f32 %v73, %v1019
      %v1021 = vand.u32 %v1020, 4294901760
      %v1022 = vsub.f32 %v1020, %v1021
      %v1023 = vand.u32 %v1022, 4294901760
      %1024 = vmatpush.msra.mxu0 %v1023
      %v1025 = vand.u32 %v72, 4294901760
      %v1026 = vsub.f32 %v72, %v1025
      %v1027 = vand.u32 %v1026, 4294901760
      %v1028 = vsub.f32 %v1026, %v1027
      %v1029 = vand.u32 %v1028, 4294901760
      %1030 = vmatpush.msra.mxu0 %v1029
      %v1031 = vand.u32 %v794, 4294901760
      %1032 = vmatmul.f32.gmra.mxu0 %v1031
      %v1033 = vpop.f32.mrf.mxu0
      %v1034 = vadd.f32 %v845, %v1033
      %v1035 = vand.u32 %v795, 4294901760
      %1036 = vmatmul.f32.gmra.mxu0 %v1035
      %v1037 = vpop.f32.mrf.mxu0
      %v1038 = vadd.f32 %v853, %v1037
      %v1039 = vand.u32 %v796, 4294901760
      %1040 = vmatmul.f32.gmra.mxu0 %v1039
      %v1041 = vpop.f32.mrf.mxu0
      %v1042 = vadd.f32 %v861, %v1041
      %v1043 = vand.u32 %v797, 4294901760
      %1044 = vmatmul.f32.gmra.mxu0 %v1043
      %v1045 = vpop.f32.mrf.mxu0
      %v1046 = vadd.f32 %v869, %v1045
      %v1047 = vand.u32 %v798, 4294901760
      %1048 = vmatmul.f32.gmra.mxu0 %v1047
      %v1049 = vpop.f32.mrf.mxu0
      %v1050 = vadd.f32 %v877, %v1049
      %v1051 = vand.u32 %v799, 4294901760
      %1052 = vmatmul.f32.gmra.mxu0 %v1051
      %v1053 = vpop.f32.mrf.mxu0
      %v1054 = vadd.f32 %v885, %v1053
      %v1055 = vand.u32 %v800, 4294901760
      %1056 = vmatmul.f32.gmra.mxu0 %v1055
      %v1057 = vpop.f32.mrf.mxu0
      %v1058 = vadd.f32 %v893, %v1057
      %v1059 = vand.u32 %v801, 4294901760
      %1060 = vmatmul.f32.gmra.mxu0 %v1059
      %v1061 = vpop.f32.mrf.mxu0
      %v1062 = vadd.f32 %v901, %v1061
      %v1063 = vand.u32 %v802, 4294901760
      %1064 = vmatmul.f32.gmra.mxu0 %v1063
      %v1065 = vpop.f32.mrf.mxu0
      %v1066 = vadd.f32 %v909, %v1065
      %v1067 = vand.u32 %v803, 4294901760
      %1068 = vmatmul.f32.gmra.mxu0 %v1067
      %v1069 = vpop.f32.mrf.mxu0
      %v1070 = vadd.f32 %v917, %v1069
      %v1071 = vand.u32 %v804, 4294901760
      %1072 = vmatmul.f32.gmra.mxu0 %v1071
      %v1073 = vpop.f32.mrf.mxu0
      %v1074 = vadd.f32 %v925, %v1073
      %v1075 = vand.u32 %v805, 4294901760
      %1076 = vmatmul.f32.gmra.mxu0 %v1075
      %v1077 = vpop.f32.mrf.mxu0
      %v1078 = vadd.f32 %v933, %v1077
      %1079 = vdwg.mxu0
      %v1080 = vand.u32 %v87, 4294901760
      %v1081 = vsub.f32 %v87, %v1080
      %1082 = vmatpush.msra.mxu0 %v1081
      %v1083 = vand.u32 %v86, 4294901760
      %v1084 = vsub.f32 %v86, %v1083
      %1085 = vmatpush.msra.mxu0 %v1084
      %v1086 = vand.u32 %v85, 4294901760
      %v1087 = vsub.f32 %v85, %v1086
      %1088 = vmatpush.msra.mxu0 %v1087
      %v1089 = vand.u32 %v84, 4294901760
      %v1090 = vsub.f32 %v84, %v1089
      %1091 = vmatpush.msra.mxu0 %v1090
      %v1092 = vand.u32 %v83, 4294901760
      %v1093 = vsub.f32 %v83, %v1092
      %1094 = vmatpush.msra.mxu0 %v1093
      %v1095 = vand.u32 %v82, 4294901760
      %v1096 = vsub.f32 %v82, %v1095
      %1097 = vmatpush.msra.mxu0 %v1096
      %v1098 = vand.u32 %v81, 4294901760
      %v1099 = vsub.f32 %v81, %v1098
      %1100 = vmatpush.msra.mxu0 %v1099
      %v1101 = vand.u32 %v80, 4294901760
      %v1102 = vsub.f32 %v80, %v1101
      %1103 = vmatpush.msra.mxu0 %v1102
      %v1104 = vand.u32 %v79, 4294901760
      %v1105 = vsub.f32 %v79, %v1104
      %1106 = vmatpush.msra.mxu0 %v1105
      %v1107 = vand.u32 %v78, 4294901760
      %v1108 = vsub.f32 %v78, %v1107
      %1109 = vmatpush.msra.mxu0 %v1108
      %v1110 = vand.u32 %v77, 4294901760
      %v1111 = vsub.f32 %v77, %v1110
      %1112 = vmatpush.msra.mxu0 %v1111
      %v1113 = vand.u32 %v76, 4294901760
      %v1114 = vsub.f32 %v76, %v1113
      %1115 = vmatpush.msra.mxu0 %v1114
      %v1116 = vand.u32 %v75, 4294901760
      %v1117 = vsub.f32 %v75, %v1116
      %1118 = vmatpush.msra.mxu0 %v1117
      %v1119 = vand.u32 %v74, 4294901760
      %v1120 = vsub.f32 %v74, %v1119
      %1121 = vmatpush.msra.mxu0 %v1120
      %v1122 = vand.u32 %v73, 4294901760
      %v1123 = vsub.f32 %v73, %v1122
      %1124 = vmatpush.msra.mxu0 %v1123
      %v1125 = vand.u32 %v72, 4294901760
      %v1126 = vsub.f32 %v72, %v1125
      %1127 = vmatpush.msra.mxu0 %v1126
      %v1128 = vand.u32 %v794, 4294901760
      %v1129 = vsub.f32 %v794, %v1128
      %1130 = vmatmul.f32.gmra.mxu0 %v1129
      %v1131 = vpop.f32.mrf.mxu0
      %v1132 = vadd.f32 %v1034, %v1131
      %v1133 = vand.u32 %v795, 4294901760
      %v1134 = vsub.f32 %v795, %v1133
      %1135 = vmatmul.f32.gmra.mxu0 %v1134
      %v1136 = vpop.f32.mrf.mxu0
      %v1137 = vadd.f32 %v1038, %v1136
      %v1138 = vand.u32 %v796, 4294901760
      %v1139 = vsub.f32 %v796, %v1138
      %1140 = vmatmul.f32.gmra.mxu0 %v1139
      %v1141 = vpop.f32.mrf.mxu0
      %v1142 = vadd.f32 %v1042, %v1141
      %v1143 = vand.u32 %v797, 4294901760
      %v1144 = vsub.f32 %v797, %v1143
      %1145 = vmatmul.f32.gmra.mxu0 %v1144
      %v1146 = vpop.f32.mrf.mxu0
      %v1147 = vadd.f32 %v1046, %v1146
      %v1148 = vand.u32 %v798, 4294901760
      %v1149 = vsub.f32 %v798, %v1148
      %1150 = vmatmul.f32.gmra.mxu0 %v1149
      %v1151 = vpop.f32.mrf.mxu0
      %v1152 = vadd.f32 %v1050, %v1151
      %v1153 = vand.u32 %v799, 4294901760
      %v1154 = vsub.f32 %v799, %v1153
      %1155 = vmatmul.f32.gmra.mxu0 %v1154
      %v1156 = vpop.f32.mrf.mxu0
      %v1157 = vadd.f32 %v1054, %v1156
      %v1158 = vand.u32 %v800, 4294901760
      %v1159 = vsub.f32 %v800, %v1158
      %1160 = vmatmul.f32.gmra.mxu0 %v1159
      %v1161 = vpop.f32.mrf.mxu0
      %v1162 = vadd.f32 %v1058, %v1161
      %v1163 = vand.u32 %v801, 4294901760
      %v1164 = vsub.f32 %v801, %v1163
      %1165 = vmatmul.f32.gmra.mxu0 %v1164
      %v1166 = vpop.f32.mrf.mxu0
      %v1167 = vadd.f32 %v1062, %v1166
      %v1168 = vand.u32 %v802, 4294901760
      %v1169 = vsub.f32 %v802, %v1168
      %1170 = vmatmul.f32.gmra.mxu0 %v1169
      %v1171 = vpop.f32.mrf.mxu0
      %v1172 = vadd.f32 %v1066, %v1171
      %v1173 = vand.u32 %v803, 4294901760
      %v1174 = vsub.f32 %v803, %v1173
      %1175 = vmatmul.f32.gmra.mxu0 %v1174
      %v1176 = vpop.f32.mrf.mxu0
      %v1177 = vadd.f32 %v1070, %v1176
      %v1178 = vand.u32 %v804, 4294901760
      %v1179 = vsub.f32 %v804, %v1178
      %1180 = vmatmul.f32.gmra.mxu0 %v1179
      %v1181 = vpop.f32.mrf.mxu0
      %v1182 = vadd.f32 %v1074, %v1181
      %v1183 = vand.u32 %v805, 4294901760
      %v1184 = vsub.f32 %v805, %v1183
      %1185 = vmatmul.f32.gmra.mxu0 %v1184
      %v1186 = vpop.f32.mrf.mxu0
      %v1187 = vadd.f32 %v1078, %v1186
      %1188 = vdwg.mxu0
      %v1189 = vand.u32 %v87, 4294901760
      %1190 = vmatpush.msra.mxu0 %v1189
      %v1191 = vand.u32 %v86, 4294901760
      %1192 = vmatpush.msra.mxu0 %v1191
      %v1193 = vand.u32 %v85, 4294901760
      %1194 = vmatpush.msra.mxu0 %v1193
      %v1195 = vand.u32 %v84, 4294901760
      %1196 = vmatpush.msra.mxu0 %v1195
      %v1197 = vand.u32 %v83, 4294901760
      %1198 = vmatpush.msra.mxu0 %v1197
      %v1199 = vand.u32 %v82, 4294901760
      %1200 = vmatpush.msra.mxu0 %v1199
      %v1201 = vand.u32 %v81, 4294901760
      %1202 = vmatpush.msra.mxu0 %v1201
      %v1203 = vand.u32 %v80, 4294901760
      %1204 = vmatpush.msra.mxu0 %v1203
      %v1205 = vand.u32 %v79, 4294901760
      %1206 = vmatpush.msra.mxu0 %v1205
      %v1207 = vand.u32 %v78, 4294901760
      %1208 = vmatpush.msra.mxu0 %v1207
      %v1209 = vand.u32 %v77, 4294901760
      %1210 = vmatpush.msra.mxu0 %v1209
      %v1211 = vand.u32 %v76, 4294901760
      %1212 = vmatpush.msra.mxu0 %v1211
      %v1213 = vand.u32 %v75, 4294901760
      %1214 = vmatpush.msra.mxu0 %v1213
      %v1215 = vand.u32 %v74, 4294901760
      %1216 = vmatpush.msra.mxu0 %v1215
      %v1217 = vand.u32 %v73, 4294901760
      %1218 = vmatpush.msra.mxu0 %v1217
      %v1219 = vand.u32 %v72, 4294901760
      %1220 = vmatpush.msra.mxu0 %v1219
      %v1221 = vand.u32 %v794, 4294901760
      %v1222 = vsub.f32 %v794, %v1221
      %v1223 = vand.u32 %v1222, 4294901760
      %1224 = vmatmul.f32.gmra.mxu0 %v1223
      %v1225 = vpop.f32.mrf.mxu0
      %v1226 = vadd.f32 %v1132, %v1225
      %v1227 = vand.u32 %v795, 4294901760
      %v1228 = vsub.f32 %v795, %v1227
      %v1229 = vand.u32 %v1228, 4294901760
      %1230 = vmatmul.f32.gmra.mxu0 %v1229
      %v1231 = vpop.f32.mrf.mxu0
      %v1232 = vadd.f32 %v1137, %v1231
      %v1233 = vand.u32 %v796, 4294901760
      %v1234 = vsub.f32 %v796, %v1233
      %v1235 = vand.u32 %v1234, 4294901760
      %1236 = vmatmul.f32.gmra.mxu0 %v1235
      %v1237 = vpop.f32.mrf.mxu0
      %v1238 = vadd.f32 %v1142, %v1237
      %v1239 = vand.u32 %v797, 4294901760
      %v1240 = vsub.f32 %v797, %v1239
      %v1241 = vand.u32 %v1240, 4294901760
      %1242 = vmatmul.f32.gmra.mxu0 %v1241
      %v1243 = vpop.f32.mrf.mxu0
      %v1244 = vadd.f32 %v1147, %v1243
      %v1245 = vand.u32 %v798, 4294901760
      %v1246 = vsub.f32 %v798, %v1245
      %v1247 = vand.u32 %v1246, 4294901760
      %1248 = vmatmul.f32.gmra.mxu0 %v1247
      %v1249 = vpop.f32.mrf.mxu0
      %v1250 = vadd.f32 %v1152, %v1249
      %v1251 = vand.u32 %v799, 4294901760
      %v1252 = vsub.f32 %v799, %v1251
      %v1253 = vand.u32 %v1252, 4294901760
      %1254 = vmatmul.f32.gmra.mxu0 %v1253
      %v1255 = vpop.f32.mrf.mxu0
      %v1256 = vadd.f32 %v1157, %v1255
      %v1257 = vand.u32 %v800, 4294901760
      %v1258 = vsub.f32 %v800, %v1257
      %v1259 = vand.u32 %v1258, 4294901760
      %1260 = vmatmul.f32.gmra.mxu0 %v1259
      %v1261 = vpop.f32.mrf.mxu0
      %v1262 = vadd.f32 %v1162, %v1261
      %v1263 = vand.u32 %v801, 4294901760
      %v1264 = vsub.f32 %v801, %v1263
      %v1265 = vand.u32 %v1264, 4294901760
      %1266 = vmatmul.f32.gmra.mxu0 %v1265
      %v1267 = vpop.f32.mrf.mxu0
      %v1268 = vadd.f32 %v1167, %v1267
      %v1269 = vand.u32 %v802, 4294901760
      %v1270 = vsub.f32 %v802, %v1269
      %v1271 = vand.u32 %v1270, 4294901760
      %1272 = vmatmul.f32.gmra.mxu0 %v1271
      %v1273 = vpop.f32.mrf.mxu0
      %v1274 = vadd.f32 %v1172, %v1273
      %v1275 = vand.u32 %v803, 4294901760
      %v1276 = vsub.f32 %v803, %v1275
      %v1277 = vand.u32 %v1276, 4294901760
      %1278 = vmatmul.f32.gmra.mxu0 %v1277
      %v1279 = vpop.f32.mrf.mxu0
      %v1280 = vadd.f32 %v1177, %v1279
      %v1281 = vand.u32 %v804, 4294901760
      %v1282 = vsub.f32 %v804, %v1281
      %v1283 = vand.u32 %v1282, 4294901760
      %1284 = vmatmul.f32.gmra.mxu0 %v1283
      %v1285 = vpop.f32.mrf.mxu0
      %v1286 = vadd.f32 %v1182, %v1285
      %v1287 = vand.u32 %v805, 4294901760
      %v1288 = vsub.f32 %v805, %v1287
      %v1289 = vand.u32 %v1288, 4294901760
      %1290 = vmatmul.f32.gmra.mxu0 %v1289
      %v1291 = vpop.f32.mrf.mxu0
      %v1292 = vadd.f32 %v1187, %v1291
      %1293 = vdwg.mxu0
      %v1294 = vand.u32 %v87, 4294901760
      %v1295 = vsub.f32 %v87, %v1294
      %v1296 = vand.u32 %v1295, 4294901760
      %1297 = vmatpush.msra.mxu0 %v1296
      %v1298 = vand.u32 %v86, 4294901760
      %v1299 = vsub.f32 %v86, %v1298
      %v1300 = vand.u32 %v1299, 4294901760
      %1301 = vmatpush.msra.mxu0 %v1300
      %v1302 = vand.u32 %v85, 4294901760
      %v1303 = vsub.f32 %v85, %v1302
      %v1304 = vand.u32 %v1303, 4294901760
      %1305 = vmatpush.msra.mxu0 %v1304
      %v1306 = vand.u32 %v84, 4294901760
      %v1307 = vsub.f32 %v84, %v1306
      %v1308 = vand.u32 %v1307, 4294901760
      %1309 = vmatpush.msra.mxu0 %v1308
      %v1310 = vand.u32 %v83, 4294901760
      %v1311 = vsub.f32 %v83, %v1310
      %v1312 = vand.u32 %v1311, 4294901760
      %1313 = vmatpush.msra.mxu0 %v1312
      %v1314 = vand.u32 %v82, 4294901760
      %v1315 = vsub.f32 %v82, %v1314
      %v1316 = vand.u32 %v1315, 4294901760
      %1317 = vmatpush.msra.mxu0 %v1316
      %v1318 = vand.u32 %v81, 4294901760
      %v1319 = vsub.f32 %v81, %v1318
      %v1320 = vand.u32 %v1319, 4294901760
      %1321 = vmatpush.msra.mxu0 %v1320
      %v1322 = vand.u32 %v80, 4294901760
      %v1323 = vsub.f32 %v80, %v1322
      %v1324 = vand.u32 %v1323, 4294901760
      %1325 = vmatpush.msra.mxu0 %v1324
      %v1326 = vand.u32 %v79, 4294901760
      %v1327 = vsub.f32 %v79, %v1326
      %v1328 = vand.u32 %v1327, 4294901760
      %1329 = vmatpush.msra.mxu0 %v1328
      %v1330 = vand.u32 %v78, 4294901760
      %v1331 = vsub.f32 %v78, %v1330
      %v1332 = vand.u32 %v1331, 4294901760
      %1333 = vmatpush.msra.mxu0 %v1332
      %v1334 = vand.u32 %v77, 4294901760
      %v1335 = vsub.f32 %v77, %v1334
      %v1336 = vand.u32 %v1335, 4294901760
      %1337 = vmatpush.msra.mxu0 %v1336
      %v1338 = vand.u32 %v76, 4294901760
      %v1339 = vsub.f32 %v76, %v1338
      %v1340 = vand.u32 %v1339, 4294901760
      %1341 = vmatpush.msra.mxu0 %v1340
      %v1342 = vand.u32 %v75, 4294901760
      %v1343 = vsub.f32 %v75, %v1342
      %v1344 = vand.u32 %v1343, 4294901760
      %1345 = vmatpush.msra.mxu0 %v1344
      %v1346 = vand.u32 %v74, 4294901760
      %v1347 = vsub.f32 %v74, %v1346
      %v1348 = vand.u32 %v1347, 4294901760
      %1349 = vmatpush.msra.mxu0 %v1348
      %v1350 = vand.u32 %v73, 4294901760
      %v1351 = vsub.f32 %v73, %v1350
      %v1352 = vand.u32 %v1351, 4294901760
      %1353 = vmatpush.msra.mxu0 %v1352
      %v1354 = vand.u32 %v72, 4294901760
      %v1355 = vsub.f32 %v72, %v1354
      %v1356 = vand.u32 %v1355, 4294901760
      %1357 = vmatpush.msra.mxu0 %v1356
      %v1358 = vand.u32 %v794, 4294901760
      %1359 = vmatmul.f32.gmra.mxu0 %v1358
      %v1360 = vpop.f32.mrf.mxu0
      %v1361 = vadd.f32 %v1226, %v1360
      %v1362 = vand.u32 %v795, 4294901760
      %1363 = vmatmul.f32.gmra.mxu0 %v1362
      %v1364 = vpop.f32.mrf.mxu0
      %v1365 = vadd.f32 %v1232, %v1364
      %v1366 = vand.u32 %v796, 4294901760
      %1367 = vmatmul.f32.gmra.mxu0 %v1366
      %v1368 = vpop.f32.mrf.mxu0
      %v1369 = vadd.f32 %v1238, %v1368
      %v1370 = vand.u32 %v797, 4294901760
      %1371 = vmatmul.f32.gmra.mxu0 %v1370
      %v1372 = vpop.f32.mrf.mxu0
      %v1373 = vadd.f32 %v1244, %v1372
      %v1374 = vand.u32 %v798, 4294901760
      %1375 = vmatmul.f32.gmra.mxu0 %v1374
      %v1376 = vpop.f32.mrf.mxu0
      %v1377 = vadd.f32 %v1250, %v1376
      %v1378 = vand.u32 %v799, 4294901760
      %1379 = vmatmul.f32.gmra.mxu0 %v1378
      %v1380 = vpop.f32.mrf.mxu0
      %v1381 = vadd.f32 %v1256, %v1380
      %v1382 = vand.u32 %v800, 4294901760
      %1383 = vmatmul.f32.gmra.mxu0 %v1382
      %v1384 = vpop.f32.mrf.mxu0
      %v1385 = vadd.f32 %v1262, %v1384
      %v1386 = vand.u32 %v801, 4294901760
      %1387 = vmatmul.f32.gmra.mxu0 %v1386
      %v1388 = vpop.f32.mrf.mxu0
      %v1389 = vadd.f32 %v1268, %v1388
      %v1390 = vand.u32 %v802, 4294901760
      %1391 = vmatmul.f32.gmra.mxu0 %v1390
      %v1392 = vpop.f32.mrf.mxu0
      %v1393 = vadd.f32 %v1274, %v1392
      %v1394 = vand.u32 %v803, 4294901760
      %1395 = vmatmul.f32.gmra.mxu0 %v1394
      %v1396 = vpop.f32.mrf.mxu0
      %v1397 = vadd.f32 %v1280, %v1396
      %v1398 = vand.u32 %v804, 4294901760
      %1399 = vmatmul.f32.gmra.mxu0 %v1398
      %v1400 = vpop.f32.mrf.mxu0
      %v1401 = vadd.f32 %v1286, %v1400
      %v1402 = vand.u32 %v805, 4294901760
      %1403 = vmatmul.f32.gmra.mxu0 %v1402
      %v1404 = vpop.f32.mrf.mxu0
      %v1405 = vadd.f32 %v1292, %v1404
      %1406 = vdwg.mxu0
      %v1407 = vand.u32 %v87, 4294901760
      %1408 = vmatpush.msra.mxu0 %v1407
      %v1409 = vand.u32 %v86, 4294901760
      %1410 = vmatpush.msra.mxu0 %v1409
      %v1411 = vand.u32 %v85, 4294901760
      %1412 = vmatpush.msra.mxu0 %v1411
      %v1413 = vand.u32 %v84, 4294901760
      %1414 = vmatpush.msra.mxu0 %v1413
      %v1415 = vand.u32 %v83, 4294901760
      %1416 = vmatpush.msra.mxu0 %v1415
      %v1417 = vand.u32 %v82, 4294901760
      %1418 = vmatpush.msra.mxu0 %v1417
      %v1419 = vand.u32 %v81, 4294901760
      %1420 = vmatpush.msra.mxu0 %v1419
      %v1421 = vand.u32 %v80, 4294901760
      %1422 = vmatpush.msra.mxu0 %v1421
      %v1423 = vand.u32 %v79, 4294901760
      %1424 = vmatpush.msra.mxu0 %v1423
      %v1425 = vand.u32 %v78, 4294901760
      %1426 = vmatpush.msra.mxu0 %v1425
      %v1427 = vand.u32 %v77, 4294901760
      %1428 = vmatpush.msra.mxu0 %v1427
      %v1429 = vand.u32 %v76, 4294901760
      %1430 = vmatpush.msra.mxu0 %v1429
      %v1431 = vand.u32 %v75, 4294901760
      %1432 = vmatpush.msra.mxu0 %v1431
      %v1433 = vand.u32 %v74, 4294901760
      %1434 = vmatpush.msra.mxu0 %v1433
      %v1435 = vand.u32 %v73, 4294901760
      %1436 = vmatpush.msra.mxu0 %v1435
      %v1437 = vand.u32 %v72, 4294901760
      %1438 = vmatpush.msra.mxu0 %v1437
      %v1439 = vand.u32 %v794, 4294901760
      %1440 = vmatmul.f32.gmra.mxu0 %v1439
      %v1441 = vpop.f32.mrf.mxu0
      %v1442 = vadd.f32 %v1361, %v1441
      %v1443 = vand.u32 %v795, 4294901760
      %1444 = vmatmul.f32.gmra.mxu0 %v1443
      %v1445 = vpop.f32.mrf.mxu0
      %v1446 = vadd.f32 %v1365, %v1445
      %v1447 = vand.u32 %v796, 4294901760
      %1448 = vmatmul.f32.gmra.mxu0 %v1447
      %v1449 = vpop.f32.mrf.mxu0
      %v1450 = vadd.f32 %v1369, %v1449
      %v1451 = vand.u32 %v797, 4294901760
      %1452 = vmatmul.f32.gmra.mxu0 %v1451
      %v1453 = vpop.f32.mrf.mxu0
      %v1454 = vadd.f32 %v1373, %v1453
      %v1455 = vand.u32 %v798, 4294901760
      %1456 = vmatmul.f32.gmra.mxu0 %v1455
      %v1457 = vpop.f32.mrf.mxu0
      %v1458 = vadd.f32 %v1377, %v1457
      %v1459 = vand.u32 %v799, 4294901760
      %1460 = vmatmul.f32.gmra.mxu0 %v1459
      %v1461 = vpop.f32.mrf.mxu0
      %v1462 = vadd.f32 %v1381, %v1461
      %v1463 = vand.u32 %v800, 4294901760
      %1464 = vmatmul.f32.gmra.mxu0 %v1463
      %v1465 = vpop.f32.mrf.mxu0
      %v1466 = vadd.f32 %v1385, %v1465
      %v1467 = vand.u32 %v801, 4294901760
      %1468 = vmatmul.f32.gmra.mxu0 %v1467
      %v1469 = vpop.f32.mrf.mxu0
      %v1470 = vadd.f32 %v1389, %v1469
      %v1471 = vand.u32 %v802, 4294901760
      %1472 = vmatmul.f32.gmra.mxu0 %v1471
      %v1473 = vpop.f32.mrf.mxu0
      %v1474 = vadd.f32 %v1393, %v1473
      %v1475 = vand.u32 %v803, 4294901760
      %1476 = vmatmul.f32.gmra.mxu0 %v1475
      %v1477 = vpop.f32.mrf.mxu0
      %v1478 = vadd.f32 %v1397, %v1477
      %v1479 = vand.u32 %v804, 4294901760
      %1480 = vmatmul.f32.gmra.mxu0 %v1479
      %v1481 = vpop.f32.mrf.mxu0
      %v1482 = vadd.f32 %v1401, %v1481
      %v1483 = vand.u32 %v805, 4294901760
      %1484 = vmatmul.f32.gmra.mxu0 %v1483
      %v1485 = vpop.f32.mrf.mxu0
      %v1486 = vadd.f32 %v1405, %v1485
      %1487 = vdwg.mxu0
      %v1488 = vmul.f32 %v1442, 0.03125
      %v1489 = vmul.f32 %v1446, 0.03125
      %v1490 = vmul.f32 %v1450, 0.03125
      %v1491 = vmul.f32 %v1454, 0.03125
      %v1492 = vmul.f32 %v1458, 0.03125
      %v1493 = vmul.f32 %v1462, 0.03125
      %v1494 = vmul.f32 %v1466, 0.03125
      %v1495 = vmul.f32 %v1470, 0.03125
      %v1496 = vmul.f32 %v1474, 0.03125
      %v1497 = vmul.f32 %v1478, 0.03125
      %v1498 = vmul.f32 %v1482, 0.03125
      %v1499 = vmul.f32 %v1486, 0.03125
      %v1500 = vadd.f32 %v1488, 1e-05
      %v1501 = vadd.f32 %v1489, 1e-05
      %v1502 = vadd.f32 %v1490, 1e-05
      %v1503 = vadd.f32 %v1491, 1e-05
      %v1504 = vadd.f32 %v1492, 1e-05
      %v1505 = vadd.f32 %v1493, 1e-05
      %v1506 = vadd.f32 %v1494, 1e-05
      %v1507 = vadd.f32 %v1495, 1e-05
      %v1508 = vadd.f32 %v1496, 1e-05
      %v1509 = vadd.f32 %v1497, 1e-05
      %v1510 = vadd.f32 %v1498, 1e-05
      %v1511 = vadd.f32 %v1499, 1e-05
      %v1512 = vrsqrt.pop %v1500
      %v1513 = vmul.f32 %v1512, %v1500
      %v1514 = vmul.f32 %v1513, %v1512
      %v1515 = vmul.f32 0.5, %v1514
      %v1516 = vsub.f32 1.5, %v1515
      %v1517 = vmul.f32 %v1512, %v1516
      %vm1518 = vweird.f32 %v1500
      %vm1519 = vweird.f32 %v1512
      %vm1520 = vmor %vm1518, %vm1519
      %v1521 = vsel %vm1520, %v1512, %v1517
      %v1522 = vrsqrt.pop %v1501
      %v1523 = vmul.f32 %v1522, %v1501
      %v1524 = vmul.f32 %v1523, %v1522
      %v1525 = vmul.f32 0.5, %v1524
      %v1526 = vsub.f32 1.5, %v1525
      %v1527 = vmul.f32 %v1522, %v1526
      %vm1528 = vweird.f32 %v1501
      %vm1529 = vweird.f32 %v1522
      %vm1530 = vmor %vm1528, %vm1529
      %v1531 = vsel %vm1530, %v1522, %v1527
      %v1532 = vrsqrt.pop %v1502
      %v1533 = vmul.f32 %v1532, %v1502
      %v1534 = vmul.f32 %v1533, %v1532
      %v1535 = vmul.f32 0.5, %v1534
      %v1536 = vsub.f32 1.5, %v1535
      %v1537 = vmul.f32 %v1532, %v1536
      %vm1538 = vweird.f32 %v1502
      %vm1539 = vweird.f32 %v1532
      %vm1540 = vmor %vm1538, %vm1539
      %v1541 = vsel %vm1540, %v1532, %v1537
      %v1542 = vrsqrt.pop %v1503
      %v1543 = vmul.f32 %v1542, %v1503
      %v1544 = vmul.f32 %v1543, %v1542
      %v1545 = vmul.f32 0.5, %v1544
      %v1546 = vsub.f32 1.5, %v1545
      %v1547 = vmul.f32 %v1542, %v1546
      %vm1548 = vweird.f32 %v1503
      %vm1549 = vweird.f32 %v1542
      %vm1550 = vmor %vm1548, %vm1549
      %v1551 = vsel %vm1550, %v1542, %v1547
      %v1552 = vrsqrt.pop %v1504
      %v1553 = vmul.f32 %v1552, %v1504
      %v1554 = vmul.f32 %v1553, %v1552
      %v1555 = vmul.f32 0.5, %v1554
      %v1556 = vsub.f32 1.5, %v1555
      %v1557 = vmul.f32 %v1552, %v1556
      %vm1558 = vweird.f32 %v1504
      %vm1559 = vweird.f32 %v1552
      %vm1560 = vmor %vm1558, %vm1559
      %v1561 = vsel %vm1560, %v1552, %v1557
      %v1562 = vrsqrt.pop %v1505
      %v1563 = vmul.f32 %v1562, %v1505
      %v1564 = vmul.f32 %v1563, %v1562
      %v1565 = vmul.f32 0.5, %v1564
      %v1566 = vsub.f32 1.5, %v1565
      %v1567 = vmul.f32 %v1562, %v1566
      %vm1568 = vweird.f32 %v1505
      %vm1569 = vweird.f32 %v1562
      %vm1570 = vmor %vm1568, %vm1569
      %v1571 = vsel %vm1570, %v1562, %v1567
      %v1572 = vrsqrt.pop %v1506
      %v1573 = vmul.f32 %v1572, %v1506
      %v1574 = vmul.f32 %v1573, %v1572
      %v1575 = vmul.f32 0.5, %v1574
      %v1576 = vsub.f32 1.5, %v1575
      %v1577 = vmul.f32 %v1572, %v1576
      %vm1578 = vweird.f32 %v1506
      %vm1579 = vweird.f32 %v1572
      %vm1580 = vmor %vm1578, %vm1579
      %v1581 = vsel %vm1580, %v1572, %v1577
      %v1582 = vrsqrt.pop %v1507
      %v1583 = vmul.f32 %v1582, %v1507
      %v1584 = vmul.f32 %v1583, %v1582
      %v1585 = vmul.f32 0.5, %v1584
      %v1586 = vsub.f32 1.5, %v1585
      %v1587 = vmul.f32 %v1582, %v1586
      %vm1588 = vweird.f32 %v1507
      %vm1589 = vweird.f32 %v1582
      %vm1590 = vmor %vm1588, %vm1589
      %v1591 = vsel %vm1590, %v1582, %v1587
      %v1592 = vrsqrt.pop %v1508
      %v1593 = vmul.f32 %v1592, %v1508
      %v1594 = vmul.f32 %v1593, %v1592
      %v1595 = vmul.f32 0.5, %v1594
      %v1596 = vsub.f32 1.5, %v1595
      %v1597 = vmul.f32 %v1592, %v1596
      %vm1598 = vweird.f32 %v1508
      %vm1599 = vweird.f32 %v1592
      %vm1600 = vmor %vm1598, %vm1599
      %v1601 = vsel %vm1600, %v1592, %v1597
      %v1602 = vrsqrt.pop %v1509
      %v1603 = vmul.f32 %v1602, %v1509
      %v1604 = vmul.f32 %v1603, %v1602
      %v1605 = vmul.f32 0.5, %v1604
      %v1606 = vsub.f32 1.5, %v1605
      %v1607 = vmul.f32 %v1602, %v1606
      %vm1608 = vweird.f32 %v1509
      %vm1609 = vweird.f32 %v1602
      %vm1610 = vmor %vm1608, %vm1609
      %v1611 = vsel %vm1610, %v1602, %v1607
      %v1612 = vrsqrt.pop %v1510
      %v1613 = vmul.f32 %v1612, %v1510
      %v1614 = vmul.f32 %v1613, %v1612
      %v1615 = vmul.f32 0.5, %v1614
      %v1616 = vsub.f32 1.5, %v1615
      %v1617 = vmul.f32 %v1612, %v1616
      %vm1618 = vweird.f32 %v1510
      %vm1619 = vweird.f32 %v1612
      %vm1620 = vmor %vm1618, %vm1619
      %v1621 = vsel %vm1620, %v1612, %v1617
      %v1622 = vrsqrt.pop %v1511
      %v1623 = vmul.f32 %v1622, %v1511
      %v1624 = vmul.f32 %v1623, %v1622
      %v1625 = vmul.f32 0.5, %v1624
      %v1626 = vsub.f32 1.5, %v1625
      %v1627 = vmul.f32 %v1622, %v1626
      %vm1628 = vweird.f32 %v1511
      %vm1629 = vweird.f32 %v1622
      %vm1630 = vmor %vm1628, %vm1629
      %v1631 = vsel %vm1630, %v1622, %v1627
      %v1632 = vmul.f32 %v782, %v1521
      %v1633 = vmul.f32 %v783, %v1531
      %v1634 = vmul.f32 %v784, %v1541
      %v1635 = vmul.f32 %v785, %v1551
      %v1636 = vmul.f32 %v786, %v1561
      %v1637 = vmul.f32 %v787, %v1571
      %v1638 = vmul.f32 %v788, %v1581
      %v1639 = vmul.f32 %v789, %v1591
      %v1640 = vmul.f32 %v790, %v1601
      %v1641 = vmul.f32 %v791, %v1611
      %v1642 = vmul.f32 %v792, %v1621
      %v1643 = vmul.f32 %v793, %v1631
      %v1645 = vperm.slane %v50, 0
      %v1647 = vmul.f32 %v1632, %v1645
      %v1648 = vmul.f32 %v1633, %v1645
      %v1649 = vmul.f32 %v1634, %v1645
      %v1650 = vmul.f32 %v1635, %v1645
      %v1651 = vmul.f32 %v1636, %v1645
      %v1652 = vmul.f32 %v1637, %v1645
      %v1653 = vmul.f32 %v1638, %v1645
      %v1654 = vmul.f32 %v1639, %v1645
      %v1655 = vmul.f32 %v1640, %v1645
      %v1656 = vmul.f32 %v1641, %v1645
      %v1657 = vmul.f32 %v1642, %v1645
      %v1658 = vmul.f32 %v1643, %v1645
      %v1660 = vperm.slane %v51, 0
      %v1662 = vadd.f32 %v1647, %v1660
      %v1663 = vadd.f32 %v1648, %v1660
      %v1664 = vadd.f32 %v1649, %v1660
      %v1665 = vadd.f32 %v1650, %v1660
      %v1666 = vadd.f32 %v1651, %v1660
      %v1667 = vadd.f32 %v1652, %v1660
      %v1668 = vadd.f32 %v1653, %v1660
      %v1669 = vadd.f32 %v1654, %v1660
      %v1670 = vadd.f32 %v1655, %v1660
      %v1671 = vadd.f32 %v1656, %v1660
      %v1672 = vadd.f32 %v1657, %v1660
      %v1673 = vadd.f32 %v1658, %v1660
      %s1674 = scalar_lea.vmem [#allocation7], %s58
      %1675 = vst [vmem:[%s1674] sm:$0xff] %v1662
      %1676 = vst [vmem:[%s1674 + $0x8] sm:$0xff] %v1663
      %1677 = vst [vmem:[%s1674 + $0x10] sm:$0xff] %v1664
      %1678 = vst [vmem:[%s1674 + $0x18] sm:$0xff] %v1665
      %1679 = vst [vmem:[%s1674 + $0x20] sm:$0xff] %v1666
      %1680 = vst [vmem:[%s1674 + $0x28] sm:$0xff] %v1667
      %1681 = vst [vmem:[%s1674 + $0x30] sm:$0xff] %v1668
      %1682 = vst [vmem:[%s1674 + $0x38] sm:$0xff] %v1669
      %1683 = vst [vmem:[%s1674 + $0x40] sm:$0xff] %v1670
      %1684 = vst [vmem:[%s1674 + $0x48] sm:$0xff] %v1671
      %1685 = vst [vmem:[%s1674 + $0x50] sm:$0xff] %v1672
      %1686 = vst [vmem:[%s1674 + $0x58] sm:$0xff] %v1673
    $region30: #{tpu_custom_call.1} parent=1 // loop_footer
      %s57 = sadd.s32 1, %s53
    $region31: #{tpu_custom_call.1} parent=1 // loop_footer_branch
      %52 = sbr.rel target = $region27
    $region32: #{tpu_custom_call.1} parent=1 // loop_exit
      _
    // Predicated region
    $region33: #{tpu_custom_call.1} parent=1 // pred_check
      _
    $region34: #{tpu_custom_call.1} parent=1 // pred_check_branch
      %1688 = sbr.rel (0) target = $region36
    $region35: #{tpu_custom_call.1} parent=1 // pred_region
      %1690 = vsyncadd [#allocation4], 1024
      %s1691 = sshll.u32 [#allocation7], 4
      %s1692 = int_to_ptr.vmem [resolvable:$true] %s1691
      %s1693 = sshll.u32 %s4, 4
      %s1694 = int_to_ptr.hbm [resolvable:$true] %s1693
      %1699 = dma.vmem_to_hbm [thread:$0]  %s1692, 2048, %s1694, [#allocation4], 128, 128, 8
    $region36: #{tpu_custom_call.1} parent=1 // pred_fallthru
      _
    // Predicated region
    $region37: #{tpu_custom_call.1} parent=1 // pred_check
      _
    $region38: #{tpu_custom_call.1} parent=1 // pred_check_branch
      %1701 = sbr.rel (0) target = $region40
    $region39: #{tpu_custom_call.1} parent=1 // pred_region
      %1703 = dma.done [#allocation4], 3072
    $region40: #{tpu_custom_call.1} parent=1 // pred_fallthru
      _
    %1704 = vsyncpa [#allocation3], 1
    %1705 = vsyncpa [#allocation6], 1
    %1706 = vsyncpa [#allocation4], 1

</llo_original>
